<compile_context>
chip_gen: v7x
topology: tpu7x:2x2x1
jax: 0.10.0
libtpu: 0.0.40
codegen_flags: <defaults>
</compile_context>

<pallas_src>
import jax
import jax.numpy as jnp
from jax import lax
from jax.experimental import pallas as pl
from jax.experimental.pallas import tpu as pltpu


# --------------------------- one-time weight prep --------------------------- #
def prepare_kernel_params(params):
    """Called once (outside the per-call path). Concatenates forward+backward
    input-projection weights/biases along N for a single hoisted MXU projection,
    casts matmul operands to bf16, and drops whh_b (h0 == 0 -> dead work)."""
    wih = jnp.concatenate([params["wih_f"], params["wih_b"]], axis=1)     # (E, 8H)
    b = jnp.concatenate([params["b_f"], params["b_b"]], axis=1)           # (1, 8H)
    return {
        "emb": params["embedding"].astype(jnp.bfloat16),                  # (V, E)
        "wih": wih.astype(jnp.bfloat16),                                  # (E, 8H)
        "b": b.astype(jnp.float32),                                       # (1, 8H)
        "whh_f": params["whh_f"].astype(jnp.bfloat16),                    # (H, 4H)
    }


# ------------------------------- wrapper + kernel --------------------------- #
def bilstm_forward(indices, kp):
    """indices: (B, T) int32 char ids.  Returns (B, 2H) float32 == output[:, T-1]."""
    emb, wih, bias, whh_f = kp["emb"], kp["wih"], kp["b"], kp["whh_f"]
    B, T = indices.shape
    E = emb.shape[1]
    H = whh_f.shape[0]
    B_PAD = -(-B // 8) * 8                          # sublane padding

    # Embedding lookup (plain-JAX glue, fused under jit), time-major, batch-padded.
    x_tm = jnp.take(emb, indices.T, axis=0)                       # (T, B, E) bf16
    if B_PAD != B:
        x_tm = jnp.pad(x_tm, ((0, 0), (0, B_PAD - B), (0, 0)))
    x_flat = x_tm.reshape(T * B_PAD, E)                           # (T*B_PAD, E)

    def sigm(v):
        # sigmoid(x) == 0.5*tanh(x/2) + 0.5 : one EUP push instead of exp+recip.
        return 0.5 * jnp.tanh(0.5 * v) + 0.5

    def kernel(x_ref, wih_ref, b_ref, whh_ref, out_ref, xw_ref):
        # ---- hoisted input projection for BOTH directions, bias folded ----- #
        xw_ref[...] = (jnp.dot(x_ref[...], wih_ref[...],
                               preferred_element_type=jnp.float32)
                       + b_ref[...])                              # (T*B_PAD, 8H) f32

        # ---- forward recurrence (fully unrolled, static slices) ------------ #
        h = jnp.zeros((B_PAD, H), jnp.float32)
        c = jnp.zeros((B_PAD, H), jnp.float32)
        for t in range(T):
            g_all = (xw_ref[t * B_PAD:(t + 1) * B_PAD, 0:4 * H]
                     + jnp.dot(h.astype(jnp.bfloat16), whh_ref[...],
                               preferred_element_type=jnp.float32))
            i = sigm(g_all[:, 0 * H:1 * H])
            f = sigm(g_all[:, 1 * H:2 * H])
            g = jnp.tanh(g_all[:, 2 * H:3 * H])
            o = sigm(g_all[:, 3 * H:4 * H])
            c = f * c + i * g
            h = o * jnp.tanh(c)

        # ---- backward direction: single step on x[T-1], zero init state ---- #
        # Its input projection already sits in the upper 4H columns of the
        # last-timestep rows of the hoisted projection (f_b * c0 == 0 dropped).
        gb = xw_ref[(T - 1) * B_PAD:T * B_PAD, 4 * H:8 * H]
        i_b = sigm(gb[:, 0 * H:1 * H])
        g_b = jnp.tanh(gb[:, 2 * H:3 * H])
        o_b = sigm(gb[:, 3 * H:4 * H])
        h_b = o_b * jnp.tanh(i_b * g_b)

        # ---- single lane-dense (B_PAD, 2H) store ---------------------------- #
        out_ref[...] = jnp.concatenate([h, h_b], axis=-1)

    full = lambda s: pl.BlockSpec(s, lambda i: (0,) * len(s))

    out = pl.pallas_call(
        kernel,
        grid=(1,),
        in_specs=[
            full((T * B_PAD, E)),       # x       (bf16)
            full((E, 8 * H)),           # W_ih fwd|bwd (bf16)
            full((1, 8 * H)),           # bias fwd|bwd (f32)
            full((H, 4 * H)),           # W_hh fwd (bf16)
        ],
        out_specs=full((B_PAD, 2 * H)),
        out_shape=jax.ShapeDtypeStruct((B_PAD, 2 * H), jnp.float32),
        scratch_shapes=[
            pltpu.VMEM((T * B_PAD, 8 * H), jnp.float32),   # hoisted XW (+bias)
        ],
        compiler_params=pltpu.CompilerParams(dimension_semantics=("arbitrary",)),
    )(x_flat, wih, bias, whh_f)
    return out[:B]


bilstm_forward_jit = jax.jit(bilstm_forward)


# --------------------------- pure-JAX reference (f32) ----------------------- #
def _lstm_cell(x_t, h, c, wih, whh, b):
    gates = x_t @ wih + h @ whh + b
    i, f, g, o = jnp.split(gates, 4, axis=-1)
    i, f, o = jax.nn.sigmoid(i), jax.nn.sigmoid(f), jax.nn.sigmoid(o)
    g = jnp.tanh(g)
    c = f * c + i * g
    h = o * jnp.tanh(c)
    return h, c


def reference_forward(indices, p):
    x = jnp.take(p["embedding"], indices, axis=0)   # (B, T, E)
    B, T, _ = x.shape
    H = p["whh_f"].shape[0]
    h0 = jnp.zeros((B, H), jnp.float32)
    c0 = jnp.zeros((B, H), jnp.float32)
    xs = jnp.transpose(x, (1, 0, 2)).astype(jnp.float32)     # (T, B, E)

    def fwd(carry, x_t):
        h, c = _lstm_cell(x_t, *carry, p["wih_f"], p["whh_f"], p["b_f"])
        return (h, c), h

    def bwd(carry, x_t):
        h, c = _lstm_cell(x_t, *carry, p["wih_b"], p["whh_b"], p["b_b"])
        return (h, c), h

    _, hs_f = lax.scan(fwd, (h0, c0), xs)
    _, hs_b = lax.scan(bwd, (h0, c0), xs[::-1])
    hs_b = hs_b[::-1]
    out_full = jnp.concatenate([hs_f, hs_b], axis=-1)        # (T, B, 2H)
    return out_full[T - 1]                                    # == output[:, T-1]


# --------------------------------- main ------------------------------------- #
def make_params(key, V, E, H):
    ks = jax.random.split(key, 9)
    xav = jnp.sqrt(6.0 / (V + E))                            # xavier_uniform_
    bound = 1.0 / jnp.sqrt(H)                                # PyTorch LSTM default init
    u = lambda k, shape, b: jax.random.uniform(k, shape, jnp.float32, -b, b)
    return {
        "embedding": u(ks[0], (V, E), xav),
        # forward direction (weights stored transposed for x @ W, gate order i,f,g,o)
        "wih_f": u(ks[1], (E, 4 * H), bound),
        "whh_f": u(ks[2], (H, 4 * H), bound),
        "b_f": (u(ks[3], (1, 4 * H), bound) + u(ks[4], (1, 4 * H), bound)),
        # backward direction
        "wih_b": u(ks[5], (E, 4 * H), bound),
        "whh_b": u(ks[6], (H, 4 * H), bound),
        "b_b": (u(ks[7], (1, 4 * H), bound) + u(ks[8], (1, 4 * H), bound)),
    }


if __name__ == "__main__":
    B, T = 4, 8           # batch of char sequences, seq length
    V, E, H = 32, 64, 64  # char vocab, embed_size=64, hidden_size=64 (module defaults)

    key = jax.random.PRNGKey(0)
    k_params, k_idx = jax.random.split(key)
    params = make_params(k_params, V, E, H)
    indices = jax.random.randint(k_idx, (B, T), 0, V, dtype=jnp.int32)

    kparams = prepare_kernel_params(params)          # one-time repack (outside hot path)
    out = jax.block_until_ready(bilstm_forward_jit(indices, kparams))

    ref = jax.block_until_ready(reference_forward(indices, params))
    assert out.shape == (B, 2 * H) and out.dtype == jnp.float32
    # bf16 matmul operands -> ~1e-3-level quantization error vs the f32 reference.
    assert jnp.allclose(out, ref, atol=2e-2, rtol=2e-2), "mismatch vs reference"

    print("KERNEL_OK")
</pallas_src>

<mosaic_0001>
module attributes {stable_mosaic.version = 11 : i64} {
  func.func @kernel(%arg0: i32, %arg1: memref<64x64xbf16, #tpu.memory_space<vmem>>, %arg2: memref<64x512xbf16, #tpu.memory_space<vmem>>, %arg3: memref<1x512xf32, #tpu.memory_space<vmem>>, %arg4: memref<64x256xbf16, #tpu.memory_space<vmem>>, %arg5: memref<8x128xf32, #tpu.memory_space<vmem>>, %arg6: memref<64x512xf32, #tpu.memory_space<vmem>>) attributes {dimension_semantics = [#tpu.dimension_semantics<arbitrary>], iteration_bounds = array<i64: 1>, scalar_prefetch = 0 : i64, scratch_operands = 1 : i64, tpu.core_type = #tpu.core_type<tc>, window_params = [{pipeline_mode = #tpu.pipeline_mode<synchronous>, transform_indices = @transform_0, window_bounds = array<i64: 64, 64>}, {pipeline_mode = #tpu.pipeline_mode<synchronous>, transform_indices = @transform_1, window_bounds = array<i64: 64, 512>}, {pipeline_mode = #tpu.pipeline_mode<synchronous>, transform_indices = @transform_2, window_bounds = array<i64: 1, 512>}, {pipeline_mode = #tpu.pipeline_mode<synchronous>, transform_indices = @transform_3, window_bounds = array<i64: 64, 256>}, {pipeline_mode = #tpu.pipeline_mode<synchronous>, transform_indices = @transform_4, window_bounds = array<i64: 8, 128>}]} {
    %c0 = arith.constant 0 : index
    %c0_0 = arith.constant 0 : index
    %0 = vector.load %arg1[%c0, %c0_0] : memref<64x64xbf16, #tpu.memory_space<vmem>>, vector<64x64xbf16>
    %c0_1 = arith.constant 0 : index
    %c0_2 = arith.constant 0 : index
    %1 = vector.load %arg2[%c0_1, %c0_2] : memref<64x512xbf16, #tpu.memory_space<vmem>>, vector<64x512xbf16>
    %cst = arith.constant dense<0.000000e+00> : vector<64x512xf32>
    %2 = tpu.matmul %0, %1, %cst {dimension_numbers = #tpu.dot_dimension_numbers<[1], [0], [0], [1], [0, 0, 1, 1], [], []>} : vector<64x64xbf16>, vector<64x512xbf16>, vector<64x512xf32> -> vector<64x512xf32>
    %c0_3 = arith.constant 0 : index
    %c0_4 = arith.constant 0 : index
    %3 = vector.load %arg3[%c0_3, %c0_4] : memref<1x512xf32, #tpu.memory_space<vmem>>, vector<1x512xf32>
    %4 = vector.broadcast %3 : vector<1x512xf32> to vector<64x512xf32>
    %5 = arith.addf %2, %4 : vector<64x512xf32>
    %c0_5 = arith.constant 0 : index
    %c0_6 = arith.constant 0 : index
    %6 = vector.load %arg6[%c0_5, %c0_6] : memref<64x512xf32, #tpu.memory_space<vmem>>, vector<64x512xf32>
    tpu.vector_store %arg6[%c0_5, %c0_6], %5 {strides = array<i32>} : memref<64x512xf32, #tpu.memory_space<vmem>>, vector<64x512xf32>,
    %cst_7 = arith.constant 0.000000e+00 : f32
    %7 = vector.broadcast %cst_7 : f32 to vector<8x64xf32>
    %cst_8 = arith.constant 0.000000e+00 : f32
    %8 = vector.broadcast %cst_8 : f32 to vector<8x64xf32>
    %c0_9 = arith.constant 0 : index
    %c0_10 = arith.constant 0 : index
    %9 = vector.load %arg6[%c0_9, %c0_10] : memref<64x512xf32, #tpu.memory_space<vmem>>, vector<8x256xf32>
    %10 = arith.truncf %7 : vector<8x64xf32> to vector<8x64xbf16>
    %c0_11 = arith.constant 0 : index
    %c0_12 = arith.constant 0 : index
    %11 = vector.load %arg4[%c0_11, %c0_12] : memref<64x256xbf16, #tpu.memory_space<vmem>>, vector<64x256xbf16>
    %cst_13 = arith.constant dense<0.000000e+00> : vector<8x256xf32>
    %12 = tpu.matmul %10, %11, %cst_13 {dimension_numbers = #tpu.dot_dimension_numbers<[1], [0], [0], [1], [0, 0, 1, 1], [], []>} : vector<8x64xbf16>, vector<64x256xbf16>, vector<8x256xf32> -> vector<8x256xf32>
    %13 = arith.addf %9, %12 : vector<8x256xf32>
    %14 = vector.extract_strided_slice %13 {offsets = [0, 0], sizes = [8, 64], strides = [1, 1]} : vector<8x256xf32> to vector<8x64xf32>
    %cst_14 = arith.constant 5.000000e-01 : f32
    %15 = vector.broadcast %cst_14 : f32 to vector<8x64xf32>
    %16 = arith.mulf %15, %14 : vector<8x64xf32>
    %17 = math.tanh %16 : vector<8x64xf32>
    %cst_15 = arith.constant 5.000000e-01 : f32
    %18 = vector.broadcast %cst_15 : f32 to vector<8x64xf32>
    %19 = arith.mulf %18, %17 : vector<8x64xf32>
    %cst_16 = arith.constant 5.000000e-01 : f32
    %20 = vector.broadcast %cst_16 : f32 to vector<8x64xf32>
    %21 = arith.addf %19, %20 : vector<8x64xf32>
    %22 = vector.extract_strided_slice %13 {offsets = [0, 64], sizes = [8, 64], strides = [1, 1]} : vector<8x256xf32> to vector<8x64xf32>
    %cst_17 = arith.constant 5.000000e-01 : f32
    %23 = vector.broadcast %cst_17 : f32 to vector<8x64xf32>
    %24 = arith.mulf %23, %22 : vector<8x64xf32>
    %25 = math.tanh %24 : vector<8x64xf32>
    %cst_18 = arith.constant 5.000000e-01 : f32
    %26 = vector.broadcast %cst_18 : f32 to vector<8x64xf32>
    %27 = arith.mulf %26, %25 : vector<8x64xf32>
    %cst_19 = arith.constant 5.000000e-01 : f32
    %28 = vector.broadcast %cst_19 : f32 to vector<8x64xf32>
    %29 = arith.addf %27, %28 : vector<8x64xf32>
    %30 = vector.extract_strided_slice %13 {offsets = [0, 128], sizes = [8, 64], strides = [1, 1]} : vector<8x256xf32> to vector<8x64xf32>
    %31 = math.tanh %30 : vector<8x64xf32>
    %32 = vector.extract_strided_slice %13 {offsets = [0, 192], sizes = [8, 64], strides = [1, 1]} : vector<8x256xf32> to vector<8x64xf32>
    %cst_20 = arith.constant 5.000000e-01 : f32
    %33 = vector.broadcast %cst_20 : f32 to vector<8x64xf32>
    %34 = arith.mulf %33, %32 : vector<8x64xf32>
    %35 = math.tanh %34 : vector<8x64xf32>
    %cst_21 = arith.constant 5.000000e-01 : f32
    %36 = vector.broadcast %cst_21 : f32 to vector<8x64xf32>
    %37 = arith.mulf %36, %35 : vector<8x64xf32>
    %cst_22 = arith.constant 5.000000e-01 : f32
    %38 = vector.broadcast %cst_22 : f32 to vector<8x64xf32>
    %39 = arith.addf %37, %38 : vector<8x64xf32>
    %40 = arith.mulf %29, %8 : vector<8x64xf32>
    %41 = arith.mulf %21, %31 : vector<8x64xf32>
    %42 = arith.addf %40, %41 : vector<8x64xf32>
    %43 = math.tanh %42 : vector<8x64xf32>
    %44 = arith.mulf %39, %43 : vector<8x64xf32>
    %c8 = arith.constant 8 : index
    %c0_23 = arith.constant 0 : index
    %45 = vector.load %arg6[%c8, %c0_23] : memref<64x512xf32, #tpu.memory_space<vmem>>, vector<8x256xf32>
    %46 = arith.truncf %44 : vector<8x64xf32> to vector<8x64xbf16>
    %c0_24 = arith.constant 0 : index
    %c0_25 = arith.constant 0 : index
    %47 = vector.load %arg4[%c0_24, %c0_25] : memref<64x256xbf16, #tpu.memory_space<vmem>>, vector<64x256xbf16>
    %cst_26 = arith.constant dense<0.000000e+00> : vector<8x256xf32>
    %48 = tpu.matmul %46, %47, %cst_26 {dimension_numbers = #tpu.dot_dimension_numbers<[1], [0], [0], [1], [0, 0, 1, 1], [], []>} : vector<8x64xbf16>, vector<64x256xbf16>, vector<8x256xf32> -> vector<8x256xf32>
    %49 = arith.addf %45, %48 : vector<8x256xf32>
    %50 = vector.extract_strided_slice %49 {offsets = [0, 0], sizes = [8, 64], strides = [1, 1]} : vector<8x256xf32> to vector<8x64xf32>
    %cst_27 = arith.constant 5.000000e-01 : f32
    %51 = vector.broadcast %cst_27 : f32 to vector<8x64xf32>
    %52 = arith.mulf %51, %50 : vector<8x64xf32>
    %53 = math.tanh %52 : vector<8x64xf32>
    %cst_28 = arith.constant 5.000000e-01 : f32
    %54 = vector.broadcast %cst_28 : f32 to vector<8x64xf32>
    %55 = arith.mulf %54, %53 : vector<8x64xf32>
    %cst_29 = arith.constant 5.000000e-01 : f32
    %56 = vector.broadcast %cst_29 : f32 to vector<8x64xf32>
    %57 = arith.addf %55, %56 : vector<8x64xf32>
    %58 = vector.extract_strided_slice %49 {offsets = [0, 64], sizes = [8, 64], strides = [1, 1]} : vector<8x256xf32> to vector<8x64xf32>
    %cst_30 = arith.constant 5.000000e-01 : f32
    %59 = vector.broadcast %cst_30 : f32 to vector<8x64xf32>
    %60 = arith.mulf %59, %58 : vector<8x64xf32>
    %61 = math.tanh %60 : vector<8x64xf32>
    %cst_31 = arith.constant 5.000000e-01 : f32
    %62 = vector.broadcast %cst_31 : f32 to vector<8x64xf32>
    %63 = arith.mulf %62, %61 : vector<8x64xf32>
    %cst_32 = arith.constant 5.000000e-01 : f32
    %64 = vector.broadcast %cst_32 : f32 to vector<8x64xf32>
    %65 = arith.addf %63, %64 : vector<8x64xf32>
    %66 = vector.extract_strided_slice %49 {offsets = [0, 128], sizes = [8, 64], strides = [1, 1]} : vector<8x256xf32> to vector<8x64xf32>
    %67 = math.tanh %66 : vector<8x64xf32>
    %68 = vector.extract_strided_slice %49 {offsets = [0, 192], sizes = [8, 64], strides = [1, 1]} : vector<8x256xf32> to vector<8x64xf32>
    %cst_33 = arith.constant 5.000000e-01 : f32
    %69 = vector.broadcast %cst_33 : f32 to vector<8x64xf32>
    %70 = arith.mulf %69, %68 : vector<8x64xf32>
    %71 = math.tanh %70 : vector<8x64xf32>
    %cst_34 = arith.constant 5.000000e-01 : f32
    %72 = vector.broadcast %cst_34 : f32 to vector<8x64xf32>
    %73 = arith.mulf %72, %71 : vector<8x64xf32>
    %cst_35 = arith.constant 5.000000e-01 : f32
    %74 = vector.broadcast %cst_35 : f32 to vector<8x64xf32>
    %75 = arith.addf %73, %74 : vector<8x64xf32>
    %76 = arith.mulf %65, %42 : vector<8x64xf32>
    %77 = arith.mulf %57, %67 : vector<8x64xf32>
    %78 = arith.addf %76, %77 : vector<8x64xf32>
    %79 = math.tanh %78 : vector<8x64xf32>
    %80 = arith.mulf %75, %79 : vector<8x64xf32>
    %c16 = arith.constant 16 : index
    %c0_36 = arith.constant 0 : index
    %81 = vector.load %arg6[%c16, %c0_36] : memref<64x512xf32, #tpu.memory_space<vmem>>, vector<8x256xf32>
    %82 = arith.truncf %80 : vector<8x64xf32> to vector<8x64xbf16>
    %c0_37 = arith.constant 0 : index
    %c0_38 = arith.constant 0 : index
    %83 = vector.load %arg4[%c0_37, %c0_38] : memref<64x256xbf16, #tpu.memory_space<vmem>>, vector<64x256xbf16>
    %cst_39 = arith.constant dense<0.000000e+00> : vector<8x256xf32>
    %84 = tpu.matmul %82, %83, %cst_39 {dimension_numbers = #tpu.dot_dimension_numbers<[1], [0], [0], [1], [0, 0, 1, 1], [], []>} : vector<8x64xbf16>, vector<64x256xbf16>, vector<8x256xf32> -> vector<8x256xf32>
    %85 = arith.addf %81, %84 : vector<8x256xf32>
    %86 = vector.extract_strided_slice %85 {offsets = [0, 0], sizes = [8, 64], strides = [1, 1]} : vector<8x256xf32> to vector<8x64xf32>
    %cst_40 = arith.constant 5.000000e-01 : f32
    %87 = vector.broadcast %cst_40 : f32 to vector<8x64xf32>
    %88 = arith.mulf %87, %86 : vector<8x64xf32>
    %89 = math.tanh %88 : vector<8x64xf32>
    %cst_41 = arith.constant 5.000000e-01 : f32
    %90 = vector.broadcast %cst_41 : f32 to vector<8x64xf32>
    %91 = arith.mulf %90, %89 : vector<8x64xf32>
    %cst_42 = arith.constant 5.000000e-01 : f32
    %92 = vector.broadcast %cst_42 : f32 to vector<8x64xf32>
    %93 = arith.addf %91, %92 : vector<8x64xf32>
    %94 = vector.extract_strided_slice %85 {offsets = [0, 64], sizes = [8, 64], strides = [1, 1]} : vector<8x256xf32> to vector<8x64xf32>
    %cst_43 = arith.constant 5.000000e-01 : f32
    %95 = vector.broadcast %cst_43 : f32 to vector<8x64xf32>
    %96 = arith.mulf %95, %94 : vector<8x64xf32>
    %97 = math.tanh %96 : vector<8x64xf32>
    %cst_44 = arith.constant 5.000000e-01 : f32
    %98 = vector.broadcast %cst_44 : f32 to vector<8x64xf32>
    %99 = arith.mulf %98, %97 : vector<8x64xf32>
    %cst_45 = arith.constant 5.000000e-01 : f32
    %100 = vector.broadcast %cst_45 : f32 to vector<8x64xf32>
    %101 = arith.addf %99, %100 : vector<8x64xf32>
    %102 = vector.extract_strided_slice %85 {offsets = [0, 128], sizes = [8, 64], strides = [1, 1]} : vector<8x256xf32> to vector<8x64xf32>
    %103 = math.tanh %102 : vector<8x64xf32>
    %104 = vector.extract_strided_slice %85 {offsets = [0, 192], sizes = [8, 64], strides = [1, 1]} : vector<8x256xf32> to vector<8x64xf32>
    %cst_46 = arith.constant 5.000000e-01 : f32
    %105 = vector.broadcast %cst_46 : f32 to vector<8x64xf32>
    %106 = arith.mulf %105, %104 : vector<8x64xf32>
    %107 = math.tanh %106 : vector<8x64xf32>
    %cst_47 = arith.constant 5.000000e-01 : f32
    %108 = vector.broadcast %cst_47 : f32 to vector<8x64xf32>
    %109 = arith.mulf %108, %107 : vector<8x64xf32>
    %cst_48 = arith.constant 5.000000e-01 : f32
    %110 = vector.broadcast %cst_48 : f32 to vector<8x64xf32>
    %111 = arith.addf %109, %110 : vector<8x64xf32>
    %112 = arith.mulf %101, %78 : vector<8x64xf32>
    %113 = arith.mulf %93, %103 : vector<8x64xf32>
    %114 = arith.addf %112, %113 : vector<8x64xf32>
    %115 = math.tanh %114 : vector<8x64xf32>
    %116 = arith.mulf %111, %115 : vector<8x64xf32>
    %c24 = arith.constant 24 : index
    %c0_49 = arith.constant 0 : index
    %117 = vector.load %arg6[%c24, %c0_49] : memref<64x512xf32, #tpu.memory_space<vmem>>, vector<8x256xf32>
    %118 = arith.truncf %116 : vector<8x64xf32> to vector<8x64xbf16>
    %c0_50 = arith.constant 0 : index
    %c0_51 = arith.constant 0 : index
    %119 = vector.load %arg4[%c0_50, %c0_51] : memref<64x256xbf16, #tpu.memory_space<vmem>>, vector<64x256xbf16>
    %cst_52 = arith.constant dense<0.000000e+00> : vector<8x256xf32>
    %120 = tpu.matmul %118, %119, %cst_52 {dimension_numbers = #tpu.dot_dimension_numbers<[1], [0], [0], [1], [0, 0, 1, 1], [], []>} : vector<8x64xbf16>, vector<64x256xbf16>, vector<8x256xf32> -> vector<8x256xf32>
    %121 = arith.addf %117, %120 : vector<8x256xf32>
    %122 = vector.extract_strided_slice %121 {offsets = [0, 0], sizes = [8, 64], strides = [1, 1]} : vector<8x256xf32> to vector<8x64xf32>
    %cst_53 = arith.constant 5.000000e-01 : f32
    %123 = vector.broadcast %cst_53 : f32 to vector<8x64xf32>
    %124 = arith.mulf %123, %122 : vector<8x64xf32>
    %125 = math.tanh %124 : vector<8x64xf32>
    %cst_54 = arith.constant 5.000000e-01 : f32
    %126 = vector.broadcast %cst_54 : f32 to vector<8x64xf32>
    %127 = arith.mulf %126, %125 : vector<8x64xf32>
    %cst_55 = arith.constant 5.000000e-01 : f32
    %128 = vector.broadcast %cst_55 : f32 to vector<8x64xf32>
    %129 = arith.addf %127, %128 : vector<8x64xf32>
    %130 = vector.extract_strided_slice %121 {offsets = [0, 64], sizes = [8, 64], strides = [1, 1]} : vector<8x256xf32> to vector<8x64xf32>
    %cst_56 = arith.constant 5.000000e-01 : f32
    %131 = vector.broadcast %cst_56 : f32 to vector<8x64xf32>
    %132 = arith.mulf %131, %130 : vector<8x64xf32>
    %133 = math.tanh %132 : vector<8x64xf32>
    %cst_57 = arith.constant 5.000000e-01 : f32
    %134 = vector.broadcast %cst_57 : f32 to vector<8x64xf32>
    %135 = arith.mulf %134, %133 : vector<8x64xf32>
    %cst_58 = arith.constant 5.000000e-01 : f32
    %136 = vector.broadcast %cst_58 : f32 to vector<8x64xf32>
    %137 = arith.addf %135, %136 : vector<8x64xf32>
    %138 = vector.extract_strided_slice %121 {offsets = [0, 128], sizes = [8, 64], strides = [1, 1]} : vector<8x256xf32> to vector<8x64xf32>
    %139 = math.tanh %138 : vector<8x64xf32>
    %140 = vector.extract_strided_slice %121 {offsets = [0, 192], sizes = [8, 64], strides = [1, 1]} : vector<8x256xf32> to vector<8x64xf32>
    %cst_59 = arith.constant 5.000000e-01 : f32
    %141 = vector.broadcast %cst_59 : f32 to vector<8x64xf32>
    %142 = arith.mulf %141, %140 : vector<8x64xf32>
    %143 = math.tanh %142 : vector<8x64xf32>
    %cst_60 = arith.constant 5.000000e-01 : f32
    %144 = vector.broadcast %cst_60 : f32 to vector<8x64xf32>
    %145 = arith.mulf %144, %143 : vector<8x64xf32>
    %cst_61 = arith.constant 5.000000e-01 : f32
    %146 = vector.broadcast %cst_61 : f32 to vector<8x64xf32>
    %147 = arith.addf %145, %146 : vector<8x64xf32>
    %148 = arith.mulf %137, %114 : vector<8x64xf32>
    %149 = arith.mulf %129, %139 : vector<8x64xf32>
    %150 = arith.addf %148, %149 : vector<8x64xf32>
    %151 = math.tanh %150 : vector<8x64xf32>
    %152 = arith.mulf %147, %151 : vector<8x64xf32>
    %c32 = arith.constant 32 : index
    %c0_62 = arith.constant 0 : index
    %153 = vector.load %arg6[%c32, %c0_62] : memref<64x512xf32, #tpu.memory_space<vmem>>, vector<8x256xf32>
    %154 = arith.truncf %152 : vector<8x64xf32> to vector<8x64xbf16>
    %c0_63 = arith.constant 0 : index
    %c0_64 = arith.constant 0 : index
    %155 = vector.load %arg4[%c0_63, %c0_64] : memref<64x256xbf16, #tpu.memory_space<vmem>>, vector<64x256xbf16>
    %cst_65 = arith.constant dense<0.000000e+00> : vector<8x256xf32>
    %156 = tpu.matmul %154, %155, %cst_65 {dimension_numbers = #tpu.dot_dimension_numbers<[1], [0], [0], [1], [0, 0, 1, 1], [], []>} : vector<8x64xbf16>, vector<64x256xbf16>, vector<8x256xf32> -> vector<8x256xf32>
    %157 = arith.addf %153, %156 : vector<8x256xf32>
    %158 = vector.extract_strided_slice %157 {offsets = [0, 0], sizes = [8, 64], strides = [1, 1]} : vector<8x256xf32> to vector<8x64xf32>
    %cst_66 = arith.constant 5.000000e-01 : f32
    %159 = vector.broadcast %cst_66 : f32 to vector<8x64xf32>
    %160 = arith.mulf %159, %158 : vector<8x64xf32>
    %161 = math.tanh %160 : vector<8x64xf32>
    %cst_67 = arith.constant 5.000000e-01 : f32
    %162 = vector.broadcast %cst_67 : f32 to vector<8x64xf32>
    %163 = arith.mulf %162, %161 : vector<8x64xf32>
    %cst_68 = arith.constant 5.000000e-01 : f32
    %164 = vector.broadcast %cst_68 : f32 to vector<8x64xf32>
    %165 = arith.addf %163, %164 : vector<8x64xf32>
    %166 = vector.extract_strided_slice %157 {offsets = [0, 64], sizes = [8, 64], strides = [1, 1]} : vector<8x256xf32> to vector<8x64xf32>
    %cst_69 = arith.constant 5.000000e-01 : f32
    %167 = vector.broadcast %cst_69 : f32 to vector<8x64xf32>
    %168 = arith.mulf %167, %166 : vector<8x64xf32>
    %169 = math.tanh %168 : vector<8x64xf32>
    %cst_70 = arith.constant 5.000000e-01 : f32
    %170 = vector.broadcast %cst_70 : f32 to vector<8x64xf32>
    %171 = arith.mulf %170, %169 : vector<8x64xf32>
    %cst_71 = arith.constant 5.000000e-01 : f32
    %172 = vector.broadcast %cst_71 : f32 to vector<8x64xf32>
    %173 = arith.addf %171, %172 : vector<8x64xf32>
    %174 = vector.extract_strided_slice %157 {offsets = [0, 128], sizes = [8, 64], strides = [1, 1]} : vector<8x256xf32> to vector<8x64xf32>
    %175 = math.tanh %174 : vector<8x64xf32>
    %176 = vector.extract_strided_slice %157 {offsets = [0, 192], sizes = [8, 64], strides = [1, 1]} : vector<8x256xf32> to vector<8x64xf32>
    %cst_72 = arith.constant 5.000000e-01 : f32
    %177 = vector.broadcast %cst_72 : f32 to vector<8x64xf32>
    %178 = arith.mulf %177, %176 : vector<8x64xf32>
    %179 = math.tanh %178 : vector<8x64xf32>
    %cst_73 = arith.constant 5.000000e-01 : f32
    %180 = vector.broadcast %cst_73 : f32 to vector<8x64xf32>
    %181 = arith.mulf %180, %179 : vector<8x64xf32>
    %cst_74 = arith.constant 5.000000e-01 : f32
    %182 = vector.broadcast %cst_74 : f32 to vector<8x64xf32>
    %183 = arith.addf %181, %182 : vector<8x64xf32>
    %184 = arith.mulf %173, %150 : vector<8x64xf32>
    %185 = arith.mulf %165, %175 : vector<8x64xf32>
    %186 = arith.addf %184, %185 : vector<8x64xf32>
    %187 = math.tanh %186 : vector<8x64xf32>
    %188 = arith.mulf %183, %187 : vector<8x64xf32>
    %c40 = arith.constant 40 : index
    %c0_75 = arith.constant 0 : index
    %189 = vector.load %arg6[%c40, %c0_75] : memref<64x512xf32, #tpu.memory_space<vmem>>, vector<8x256xf32>
    %190 = arith.truncf %188 : vector<8x64xf32> to vector<8x64xbf16>
    %c0_76 = arith.constant 0 : index
    %c0_77 = arith.constant 0 : index
    %191 = vector.load %arg4[%c0_76, %c0_77] : memref<64x256xbf16, #tpu.memory_space<vmem>>, vector<64x256xbf16>
    %cst_78 = arith.constant dense<0.000000e+00> : vector<8x256xf32>
    %192 = tpu.matmul %190, %191, %cst_78 {dimension_numbers = #tpu.dot_dimension_numbers<[1], [0], [0], [1], [0, 0, 1, 1], [], []>} : vector<8x64xbf16>, vector<64x256xbf16>, vector<8x256xf32> -> vector<8x256xf32>
    %193 = arith.addf %189, %192 : vector<8x256xf32>
    %194 = vector.extract_strided_slice %193 {offsets = [0, 0], sizes = [8, 64], strides = [1, 1]} : vector<8x256xf32> to vector<8x64xf32>
    %cst_79 = arith.constant 5.000000e-01 : f32
    %195 = vector.broadcast %cst_79 : f32 to vector<8x64xf32>
    %196 = arith.mulf %195, %194 : vector<8x64xf32>
    %197 = math.tanh %196 : vector<8x64xf32>
    %cst_80 = arith.constant 5.000000e-01 : f32
    %198 = vector.broadcast %cst_80 : f32 to vector<8x64xf32>
    %199 = arith.mulf %198, %197 : vector<8x64xf32>
    %cst_81 = arith.constant 5.000000e-01 : f32
    %200 = vector.broadcast %cst_81 : f32 to vector<8x64xf32>
    %201 = arith.addf %199, %200 : vector<8x64xf32>
    %202 = vector.extract_strided_slice %193 {offsets = [0, 64], sizes = [8, 64], strides = [1, 1]} : vector<8x256xf32> to vector<8x64xf32>
    %cst_82 = arith.constant 5.000000e-01 : f32
    %203 = vector.broadcast %cst_82 : f32 to vector<8x64xf32>
    %204 = arith.mulf %203, %202 : vector<8x64xf32>
    %205 = math.tanh %204 : vector<8x64xf32>
    %cst_83 = arith.constant 5.000000e-01 : f32
    %206 = vector.broadcast %cst_83 : f32 to vector<8x64xf32>
    %207 = arith.mulf %206, %205 : vector<8x64xf32>
    %cst_84 = arith.constant 5.000000e-01 : f32
    %208 = vector.broadcast %cst_84 : f32 to vector<8x64xf32>
    %209 = arith.addf %207, %208 : vector<8x64xf32>
    %210 = vector.extract_strided_slice %193 {offsets = [0, 128], sizes = [8, 64], strides = [1, 1]} : vector<8x256xf32> to vector<8x64xf32>
    %211 = math.tanh %210 : vector<8x64xf32>
    %212 = vector.extract_strided_slice %193 {offsets = [0, 192], sizes = [8, 64], strides = [1, 1]} : vector<8x256xf32> to vector<8x64xf32>
    %cst_85 = arith.constant 5.000000e-01 : f32
    %213 = vector.broadcast %cst_85 : f32 to vector<8x64xf32>
    %214 = arith.mulf %213, %212 : vector<8x64xf32>
    %215 = math.tanh %214 : vector<8x64xf32>
    %cst_86 = arith.constant 5.000000e-01 : f32
    %216 = vector.broadcast %cst_86 : f32 to vector<8x64xf32>
    %217 = arith.mulf %216, %215 : vector<8x64xf32>
    %cst_87 = arith.constant 5.000000e-01 : f32
    %218 = vector.broadcast %cst_87 : f32 to vector<8x64xf32>
    %219 = arith.addf %217, %218 : vector<8x64xf32>
    %220 = arith.mulf %209, %186 : vector<8x64xf32>
    %221 = arith.mulf %201, %211 : vector<8x64xf32>
    %222 = arith.addf %220, %221 : vector<8x64xf32>
    %223 = math.tanh %222 : vector<8x64xf32>
    %224 = arith.mulf %219, %223 : vector<8x64xf32>
    %c48 = arith.constant 48 : index
    %c0_88 = arith.constant 0 : index
    %225 = vector.load %arg6[%c48, %c0_88] : memref<64x512xf32, #tpu.memory_space<vmem>>, vector<8x256xf32>
    %226 = arith.truncf %224 : vector<8x64xf32> to vector<8x64xbf16>
    %c0_89 = arith.constant 0 : index
    %c0_90 = arith.constant 0 : index
    %227 = vector.load %arg4[%c0_89, %c0_90] : memref<64x256xbf16, #tpu.memory_space<vmem>>, vector<64x256xbf16>
    %cst_91 = arith.constant dense<0.000000e+00> : vector<8x256xf32>
    %228 = tpu.matmul %226, %227, %cst_91 {dimension_numbers = #tpu.dot_dimension_numbers<[1], [0], [0], [1], [0, 0, 1, 1], [], []>} : vector<8x64xbf16>, vector<64x256xbf16>, vector<8x256xf32> -> vector<8x256xf32>
    %229 = arith.addf %225, %228 : vector<8x256xf32>
    %230 = vector.extract_strided_slice %229 {offsets = [0, 0], sizes = [8, 64], strides = [1, 1]} : vector<8x256xf32> to vector<8x64xf32>
    %cst_92 = arith.constant 5.000000e-01 : f32
    %231 = vector.broadcast %cst_92 : f32 to vector<8x64xf32>
    %232 = arith.mulf %231, %230 : vector<8x64xf32>
    %233 = math.tanh %232 : vector<8x64xf32>
    %cst_93 = arith.constant 5.000000e-01 : f32
    %234 = vector.broadcast %cst_93 : f32 to vector<8x64xf32>
    %235 = arith.mulf %234, %233 : vector<8x64xf32>
    %cst_94 = arith.constant 5.000000e-01 : f32
    %236 = vector.broadcast %cst_94 : f32 to vector<8x64xf32>
    %237 = arith.addf %235, %236 : vector<8x64xf32>
    %238 = vector.extract_strided_slice %229 {offsets = [0, 64], sizes = [8, 64], strides = [1, 1]} : vector<8x256xf32> to vector<8x64xf32>
    %cst_95 = arith.constant 5.000000e-01 : f32
    %239 = vector.broadcast %cst_95 : f32 to vector<8x64xf32>
    %240 = arith.mulf %239, %238 : vector<8x64xf32>
    %241 = math.tanh %240 : vector<8x64xf32>
    %cst_96 = arith.constant 5.000000e-01 : f32
    %242 = vector.broadcast %cst_96 : f32 to vector<8x64xf32>
    %243 = arith.mulf %242, %241 : vector<8x64xf32>
    %cst_97 = arith.constant 5.000000e-01 : f32
    %244 = vector.broadcast %cst_97 : f32 to vector<8x64xf32>
    %245 = arith.addf %243, %244 : vector<8x64xf32>
    %246 = vector.extract_strided_slice %229 {offsets = [0, 128], sizes = [8, 64], strides = [1, 1]} : vector<8x256xf32> to vector<8x64xf32>
    %247 = math.tanh %246 : vector<8x64xf32>
    %248 = vector.extract_strided_slice %229 {offsets = [0, 192], sizes = [8, 64], strides = [1, 1]} : vector<8x256xf32> to vector<8x64xf32>
    %cst_98 = arith.constant 5.000000e-01 : f32
    %249 = vector.broadcast %cst_98 : f32 to vector<8x64xf32>
    %250 = arith.mulf %249, %248 : vector<8x64xf32>
    %251 = math.tanh %250 : vector<8x64xf32>
    %cst_99 = arith.constant 5.000000e-01 : f32
    %252 = vector.broadcast %cst_99 : f32 to vector<8x64xf32>
    %253 = arith.mulf %252, %251 : vector<8x64xf32>
    %cst_100 = arith.constant 5.000000e-01 : f32
    %254 = vector.broadcast %cst_100 : f32 to vector<8x64xf32>
    %255 = arith.addf %253, %254 : vector<8x64xf32>
    %256 = arith.mulf %245, %222 : vector<8x64xf32>
    %257 = arith.mulf %237, %247 : vector<8x64xf32>
    %258 = arith.addf %256, %257 : vector<8x64xf32>
    %259 = math.tanh %258 : vector<8x64xf32>
    %260 = arith.mulf %255, %259 : vector<8x64xf32>
    %c56 = arith.constant 56 : index
    %c0_101 = arith.constant 0 : index
    %261 = vector.load %arg6[%c56, %c0_101] : memref<64x512xf32, #tpu.memory_space<vmem>>, vector<8x256xf32>
    %262 = arith.truncf %260 : vector<8x64xf32> to vector<8x64xbf16>
    %c0_102 = arith.constant 0 : index
    %c0_103 = arith.constant 0 : index
    %263 = vector.load %arg4[%c0_102, %c0_103] : memref<64x256xbf16, #tpu.memory_space<vmem>>, vector<64x256xbf16>
    %cst_104 = arith.constant dense<0.000000e+00> : vector<8x256xf32>
    %264 = tpu.matmul %262, %263, %cst_104 {dimension_numbers = #tpu.dot_dimension_numbers<[1], [0], [0], [1], [0, 0, 1, 1], [], []>} : vector<8x64xbf16>, vector<64x256xbf16>, vector<8x256xf32> -> vector<8x256xf32>
    %265 = arith.addf %261, %264 : vector<8x256xf32>
    %266 = vector.extract_strided_slice %265 {offsets = [0, 0], sizes = [8, 64], strides = [1, 1]} : vector<8x256xf32> to vector<8x64xf32>
    %cst_105 = arith.constant 5.000000e-01 : f32
    %267 = vector.broadcast %cst_105 : f32 to vector<8x64xf32>
    %268 = arith.mulf %267, %266 : vector<8x64xf32>
    %269 = math.tanh %268 : vector<8x64xf32>
    %cst_106 = arith.constant 5.000000e-01 : f32
    %270 = vector.broadcast %cst_106 : f32 to vector<8x64xf32>
    %271 = arith.mulf %270, %269 : vector<8x64xf32>
    %cst_107 = arith.constant 5.000000e-01 : f32
    %272 = vector.broadcast %cst_107 : f32 to vector<8x64xf32>
    %273 = arith.addf %271, %272 : vector<8x64xf32>
    %274 = vector.extract_strided_slice %265 {offsets = [0, 64], sizes = [8, 64], strides = [1, 1]} : vector<8x256xf32> to vector<8x64xf32>
    %cst_108 = arith.constant 5.000000e-01 : f32
    %275 = vector.broadcast %cst_108 : f32 to vector<8x64xf32>
    %276 = arith.mulf %275, %274 : vector<8x64xf32>
    %277 = math.tanh %276 : vector<8x64xf32>
    %cst_109 = arith.constant 5.000000e-01 : f32
    %278 = vector.broadcast %cst_109 : f32 to vector<8x64xf32>
    %279 = arith.mulf %278, %277 : vector<8x64xf32>
    %cst_110 = arith.constant 5.000000e-01 : f32
    %280 = vector.broadcast %cst_110 : f32 to vector<8x64xf32>
    %281 = arith.addf %279, %280 : vector<8x64xf32>
    %282 = vector.extract_strided_slice %265 {offsets = [0, 128], sizes = [8, 64], strides = [1, 1]} : vector<8x256xf32> to vector<8x64xf32>
    %283 = math.tanh %282 : vector<8x64xf32>
    %284 = vector.extract_strided_slice %265 {offsets = [0, 192], sizes = [8, 64], strides = [1, 1]} : vector<8x256xf32> to vector<8x64xf32>
    %cst_111 = arith.constant 5.000000e-01 : f32
    %285 = vector.broadcast %cst_111 : f32 to vector<8x64xf32>
    %286 = arith.mulf %285, %284 : vector<8x64xf32>
    %287 = math.tanh %286 : vector<8x64xf32>
    %cst_112 = arith.constant 5.000000e-01 : f32
    %288 = vector.broadcast %cst_112 : f32 to vector<8x64xf32>
    %289 = arith.mulf %288, %287 : vector<8x64xf32>
    %cst_113 = arith.constant 5.000000e-01 : f32
    %290 = vector.broadcast %cst_113 : f32 to vector<8x64xf32>
    %291 = arith.addf %289, %290 : vector<8x64xf32>
    %292 = arith.mulf %281, %258 : vector<8x64xf32>
    %293 = arith.mulf %273, %283 : vector<8x64xf32>
    %294 = arith.addf %292, %293 : vector<8x64xf32>
    %295 = math.tanh %294 : vector<8x64xf32>
    %296 = arith.mulf %291, %295 : vector<8x64xf32>
    %c56_114 = arith.constant 56 : index
    %c256 = arith.constant 256 : index
    %297 = vector.load %arg6[%c56_114, %c256] : memref<64x512xf32, #tpu.memory_space<vmem>>, vector<8x256xf32>
    %298 = vector.extract_strided_slice %297 {offsets = [0, 0], sizes = [8, 64], strides = [1, 1]} : vector<8x256xf32> to vector<8x64xf32>
    %cst_115 = arith.constant 5.000000e-01 : f32
    %299 = vector.broadcast %cst_115 : f32 to vector<8x64xf32>
    %300 = arith.mulf %299, %298 : vector<8x64xf32>
    %301 = math.tanh %300 : vector<8x64xf32>
    %cst_116 = arith.constant 5.000000e-01 : f32
    %302 = vector.broadcast %cst_116 : f32 to vector<8x64xf32>
    %303 = arith.mulf %302, %301 : vector<8x64xf32>
    %cst_117 = arith.constant 5.000000e-01 : f32
    %304 = vector.broadcast %cst_117 : f32 to vector<8x64xf32>
    %305 = arith.addf %303, %304 : vector<8x64xf32>
    %306 = vector.extract_strided_slice %297 {offsets = [0, 128], sizes = [8, 64], strides = [1, 1]} : vector<8x256xf32> to vector<8x64xf32>
    %307 = math.tanh %306 : vector<8x64xf32>
    %308 = vector.extract_strided_slice %297 {offsets = [0, 192], sizes = [8, 64], strides = [1, 1]} : vector<8x256xf32> to vector<8x64xf32>
    %cst_118 = arith.constant 5.000000e-01 : f32
    %309 = vector.broadcast %cst_118 : f32 to vector<8x64xf32>
    %310 = arith.mulf %309, %308 : vector<8x64xf32>
    %311 = math.tanh %310 : vector<8x64xf32>
    %cst_119 = arith.constant 5.000000e-01 : f32
    %312 = vector.broadcast %cst_119 : f32 to vector<8x64xf32>
    %313 = arith.mulf %312, %311 : vector<8x64xf32>
    %cst_120 = arith.constant 5.000000e-01 : f32
    %314 = vector.broadcast %cst_120 : f32 to vector<8x64xf32>
    %315 = arith.addf %313, %314 : vector<8x64xf32>
    %316 = arith.mulf %305, %307 : vector<8x64xf32>
    %317 = math.tanh %316 : vector<8x64xf32>
    %318 = arith.mulf %315, %317 : vector<8x64xf32>
    %319 = tpu.concatenate %296, %318 in 1 : vector<8x64xf32>, vector<8x64xf32> -> vector<8x128xf32>
    %c0_121 = arith.constant 0 : index
    %c0_122 = arith.constant 0 : index
    %320 = vector.load %arg5[%c0_121, %c0_122] : memref<8x128xf32, #tpu.memory_space<vmem>>, vector<8x128xf32>
    tpu.vector_store %arg5[%c0_121, %c0_122], %319 {strides = array<i32>} : memref<8x128xf32, #tpu.memory_space<vmem>>, vector<8x128xf32>,
    return
  }
  func.func @transform_0(%arg0: i32) -> (i32, i32) {
    %c0_i32 = arith.constant 0 : i32
    %c0_i32_0 = arith.constant 0 : i32
    %c0_i32_1 = arith.constant 0 : i32
    return %c0_i32, %c0_i32_0 : i32, i32
  }
  func.func @transform_1(%arg0: i32) -> (i32, i32) {
    %c0_i32 = arith.constant 0 : i32
    %c0_i32_0 = arith.constant 0 : i32
    %c0_i32_1 = arith.constant 0 : i32
    return %c0_i32, %c0_i32_0 : i32, i32
  }
  func.func @transform_2(%arg0: i32) -> (i32, i32) {
    %c0_i32 = arith.constant 0 : i32
    %c0_i32_0 = arith.constant 0 : i32
    %c0_i32_1 = arith.constant 0 : i32
    return %c0_i32, %c0_i32_0 : i32, i32
  }
  func.func @transform_3(%arg0: i32) -> (i32, i32) {
    %c0_i32 = arith.constant 0 : i32
    %c0_i32_0 = arith.constant 0 : i32
    %c0_i32_1 = arith.constant 0 : i32
    return %c0_i32, %c0_i32_0 : i32, i32
  }
  func.func @transform_4(%arg0: i32) -> (i32, i32) {
    %c0_i32 = arith.constant 0 : i32
    %c0_i32_0 = arith.constant 0 : i32
    %c0_i32_1 = arith.constant 0 : i32
    return %c0_i32, %c0_i32_0 : i32, i32
  }
}

</mosaic_0001>

<llo_original>
// kernel: bilstm_forward.1
$region0: #{bilstm_forward.1}
  #allocation0 [shape = 'u32[]', space=smem, size = 0x4, offset = 0x4, fixed_abs, tag = 'smem constant byte address 0x4 - core index']
  #allocation1 [shape = 'u32[144,128]{1,0:T(1,128)}', space=vmem, size = 0x12000, scoped, tag = 'internal scratch']
  #allocation2 [shape = 'f32[64,512]{1,0:T(8,128)}', space=vmem, size = 0x20000, scoped, tag = 'scratch operand']
  %s0 = inlined_call_operand.vmem [shape: bf16[64,64], index: 0, kind: input, shape index: {}]
  %s1 = inlined_call_operand.vmem [shape: bf16[64,512], index: 1, kind: input, shape index: {}]
  %s2 = inlined_call_operand.vmem [shape: f32[1,512], index: 2, kind: input, shape index: {}]
  %s3 = inlined_call_operand.vmem [shape: bf16[64,256], index: 3, kind: input, shape index: {}]
  %s4 = inlined_call_operand.vmem [shape: f32[8,128], index: 4, kind: output, shape index: {}]
  %s5 = sld [smem:[#allocation0]]
  $region26: #{bilstm_forward.1} parent=0
    _
  %s7 = ssub.s32 1, %s5
  %s8 = scalar_select 0, %s7, %s5
  // Predicated region
  $region2: #{bilstm_forward.1} parent=0 // pred_check
    _
  $region3: #{bilstm_forward.1} parent=0 // pred_check_branch
    %10 = sbr.rel (0) target = $region5
  $region4: #{bilstm_forward.1} parent=0 // pred_region
    _
  $region5: #{bilstm_forward.1} parent=0 // pred_fallthru
    _
  // Predicated region
  $region6: #{bilstm_forward.1} parent=0 // pred_check
    _
  $region7: #{bilstm_forward.1} parent=0 // pred_check_branch
    %12 = sbr.rel (0) target = $region9
  $region8: #{bilstm_forward.1} parent=0 // pred_region
    _
  $region9: #{bilstm_forward.1} parent=0 // pred_fallthru
    _
  // Predicated region
  $region10: #{bilstm_forward.1} parent=0 // pred_check
    _
  $region11: #{bilstm_forward.1} parent=0 // pred_check_branch
    %14 = sbr.rel (0) target = $region13
  $region12: #{bilstm_forward.1} parent=0 // pred_region
    _
  $region13: #{bilstm_forward.1} parent=0 // pred_fallthru
    _
  // Predicated region
  $region14: #{bilstm_forward.1} parent=0 // pred_check
    _
  $region15: #{bilstm_forward.1} parent=0 // pred_check_branch
    %16 = sbr.rel (0) target = $region17
  $region16: #{bilstm_forward.1} parent=0 // pred_region
    _
  $region17: #{bilstm_forward.1} parent=0 // pred_fallthru
    _
  %v18 = vld [vmem:[%s0] sm:$0xf]
  %v19 = vld [vmem:[%s0 + $0x4] sm:$0xf]
  %v20 = vld [vmem:[%s0 + $0x8] sm:$0xf]
  %v21 = vld [vmem:[%s0 + $0xc] sm:$0xf]
  %v22 = vld [vmem:[%s0 + $0x10] sm:$0xf]
  %v23 = vld [vmem:[%s0 + $0x14] sm:$0xf]
  %v24 = vld [vmem:[%s0 + $0x18] sm:$0xf]
  %v25 = vld [vmem:[%s0 + $0x1c] sm:$0xf]
  %v26 = vld [vmem:[%s1] sm:$0xff]
  %v27 = vld [vmem:[%s1 + $0x8] sm:$0xff]
  %v28 = vld [vmem:[%s1 + $0x10] sm:$0xff]
  %v29 = vld [vmem:[%s1 + $0x18] sm:$0xff]
  %v30 = vld [vmem:[%s1 + $0x20] sm:$0xff]
  %v31 = vld [vmem:[%s1 + $0x28] sm:$0xff]
  %v32 = vld [vmem:[%s1 + $0x30] sm:$0xff]
  %v33 = vld [vmem:[%s1 + $0x38] sm:$0xff]
  %v34 = vld [vmem:[%s1 + $0x40] sm:$0xff]
  %v35 = vld [vmem:[%s1 + $0x48] sm:$0xff]
  %v36 = vld [vmem:[%s1 + $0x50] sm:$0xff]
  %v37 = vld [vmem:[%s1 + $0x58] sm:$0xff]
  %v38 = vld [vmem:[%s1 + $0x60] sm:$0xff]
  %v39 = vld [vmem:[%s1 + $0x68] sm:$0xff]
  %v40 = vld [vmem:[%s1 + $0x70] sm:$0xff]
  %v41 = vld [vmem:[%s1 + $0x78] sm:$0xff]
  %v42 = vld [vmem:[%s2] sm:$0xf]
  %v44 = vlaneseq
  %v45 = vshrl.u32 %v44, 7
  %v46 = vsub.s32 0, %v45
  %v47 = vrot.slane %v42, %v46
  %v48 = vlaneseq
  %v49 = vshrl.u32 %v48, 7
  %v50 = vsub.s32 1, %v49
  %v51 = vrot.slane %v42, %v50
  %v52 = vlaneseq
  %v53 = vshrl.u32 %v52, 7
  %v54 = vsub.s32 2, %v53
  %v55 = vrot.slane %v42, %v54
  %v56 = vlaneseq
  %v57 = vshrl.u32 %v56, 7
  %v58 = vsub.s32 3, %v57
  %v59 = vrot.slane %v42, %v58
  %v72 = vunpack.c.l.b16 %v18
  %v73 = vunpack.c.l.b16 %v19
  %v74 = vunpack.c.l.b16 %v20
  %v75 = vunpack.c.l.b16 %v21
  %v76 = vunpack.c.l.b16 %v22
  %v77 = vunpack.c.l.b16 %v23
  %v78 = vunpack.c.l.b16 %v24
  %v79 = vunpack.c.l.b16 %v25
  %v80 = vpack.c.b16 %v73, %v72
  %v81 = vpack.c.b16 %v75, %v74
  %v82 = vpack.c.b16 %v77, %v76
  %v83 = vpack.c.b16 %v79, %v78
  %v100 = vunpack.c.l.b16 %v26
  %v101 = vunpack.c.h.b16 %v26
  %v102 = vunpack.c.l.b16 %v27
  %v103 = vunpack.c.h.b16 %v27
  %v104 = vunpack.c.l.b16 %v28
  %v105 = vunpack.c.h.b16 %v28
  %v106 = vunpack.c.l.b16 %v29
  %v107 = vunpack.c.h.b16 %v29
  %v108 = vunpack.c.l.b16 %v30
  %v109 = vunpack.c.h.b16 %v30
  %v110 = vunpack.c.l.b16 %v31
  %v111 = vunpack.c.h.b16 %v31
  %v112 = vunpack.c.l.b16 %v32
  %v113 = vunpack.c.h.b16 %v32
  %v114 = vunpack.c.l.b16 %v33
  %v115 = vunpack.c.h.b16 %v33
  %v116 = vunpack.c.l.b16 %v34
  %v117 = vunpack.c.h.b16 %v34
  %v118 = vunpack.c.l.b16 %v35
  %v119 = vunpack.c.h.b16 %v35
  %v120 = vunpack.c.l.b16 %v36
  %v121 = vunpack.c.h.b16 %v36
  %v122 = vunpack.c.l.b16 %v37
  %v123 = vunpack.c.h.b16 %v37
  %v124 = vunpack.c.l.b16 %v38
  %v125 = vunpack.c.h.b16 %v38
  %v126 = vunpack.c.l.b16 %v39
  %v127 = vunpack.c.h.b16 %v39
  %v128 = vunpack.c.l.b16 %v40
  %v129 = vunpack.c.h.b16 %v40
  %v130 = vunpack.c.l.b16 %v41
  %v131 = vunpack.c.h.b16 %v41
  %v132 = vpack.c.b16 %v104, %v100
  %v133 = vpack.c.b16 %v105, %v101
  %v134 = vpack.c.b16 %v106, %v102
  %v135 = vpack.c.b16 %v107, %v103
  %v136 = vpack.c.b16 %v112, %v108
  %v137 = vpack.c.b16 %v113, %v109
  %v138 = vpack.c.b16 %v114, %v110
  %v139 = vpack.c.b16 %v115, %v111
  %v140 = vpack.c.b16 %v120, %v116
  %v141 = vpack.c.b16 %v121, %v117
  %v142 = vpack.c.b16 %v122, %v118
  %v143 = vpack.c.b16 %v123, %v119
  %v144 = vpack.c.b16 %v128, %v124
  %v145 = vpack.c.b16 %v129, %v125
  %v146 = vpack.c.b16 %v130, %v126
  %v147 = vpack.c.b16 %v131, %v127
  %vm164 = vcmask 523264
  %v166 = vsel %vm164, %v80, 0
  %v169 = vsel %vm164, %v81, 0
  %v172 = vsel %vm164, %v82, 0
  %v175 = vsel %vm164, %v83, 0
  %177 = vmatprep.subr.bf16.mxu0 %v133
  %178 = vmatpush1.bf16.msra.mxu0 %v132
  %179 = vmatprep.subr.bf16.mxu0 %v137
  %180 = vmatpush1.bf16.msra.mxu0 %v136
  %181 = vmatprep.subr.bf16.mxu0 %v141
  %182 = vmatpush1.bf16.msra.mxu0 %v140
  %183 = vmatprep.subr.bf16.mxu0 %v145
  %184 = vmatpush1.bf16.msra.mxu0 %v144
  %185 = vmatprep.subr.bf16.mxu0 0
  %186 = vmatpush1.bf16.msra.mxu0 0
  %187 = vmatprep.subr.bf16.mxu0 0
  %188 = vmatpush1.bf16.msra.mxu0 0
  %189 = vmatprep.subr.bf16.mxu0 0
  %190 = vmatpush1.bf16.msra.mxu0 0
  %191 = vmatprep.subr.bf16.mxu0 0
  %192 = vmatpush1.bf16.msra.mxu0 0
  %193 = vmatprep.subr.bf16.mxu0 0
  %194 = vmatpush1.bf16.msra.mxu0 0
  %195 = vmatprep.subr.bf16.mxu0 0
  %196 = vmatpush1.bf16.msra.mxu0 0
  %197 = vmatprep.subr.bf16.mxu0 0
  %198 = vmatpush1.bf16.msra.mxu0 0
  %199 = vmatprep.subr.bf16.mxu0 0
  %200 = vmatpush1.bf16.msra.mxu0 0
  %201 = vmatprep.subr.bf16.mxu0 0
  %202 = vmatpush1.bf16.msra.mxu0 0
  %203 = vmatprep.subr.bf16.mxu0 0
  %204 = vmatpush1.bf16.msra.mxu0 0
  %205 = vmatprep.subr.bf16.mxu0 0
  %206 = vmatpush1.bf16.msra.mxu0 0
  %207 = vmatprep.subr.bf16.mxu0 0
  %208 = vmatpush1.bf16.msra.mxu0 0
  %209 = vmatprep.mubr.bf16.mxu0 0
  %210 = vmatmul.mubr.bf16.gmra.mrb[0].mxu0 %v166
  %v211 = vpop.f32.mrb[0].mxu0
  %v212 = vadd.f32 %v47, %v211
  %v213 = vpop.f32.mrb[0].mxu0
  %v214 = vadd.f32 %v51, %v213
  %v215 = vpop.f32.mrb[0].mxu0
  %v216 = vadd.f32 %v47, %v215
  %v217 = vpop.f32.mrb[0].mxu0
  %v218 = vadd.f32 %v51, %v217
  %219 = vmatprep.mubr.bf16.mxu0 0
  %220 = vmatmul.mubr.bf16.gmra.mrb[0].mxu0 %v169
  %v221 = vpop.f32.mrb[0].mxu0
  %v222 = vadd.f32 %v47, %v221
  %v223 = vpop.f32.mrb[0].mxu0
  %v224 = vadd.f32 %v51, %v223
  %v225 = vpop.f32.mrb[0].mxu0
  %v226 = vadd.f32 %v47, %v225
  %v227 = vpop.f32.mrb[0].mxu0
  %v228 = vadd.f32 %v51, %v227
  %229 = vmatprep.mubr.bf16.mxu0 0
  %230 = vmatmul.mubr.bf16.gmra.mrb[0].mxu0 %v172
  %v231 = vpop.f32.mrb[0].mxu0
  %v232 = vadd.f32 %v47, %v231
  %v233 = vpop.f32.mrb[0].mxu0
  %v234 = vadd.f32 %v51, %v233
  %v235 = vpop.f32.mrb[0].mxu0
  %v236 = vadd.f32 %v47, %v235
  %v237 = vpop.f32.mrb[0].mxu0
  %v238 = vadd.f32 %v51, %v237
  %239 = vmatprep.mubr.bf16.mxu0 0
  %240 = vmatmul.mubr.bf16.gmra.mrb[0].mxu0 %v175
  %v241 = vpop.f32.mrb[0].mxu0
  %v242 = vadd.f32 %v47, %v241
  %v243 = vpop.f32.mrb[0].mxu0
  %v244 = vadd.f32 %v51, %v243
  %v245 = vpop.f32.mrb[0].mxu0
  %v246 = vadd.f32 %v47, %v245
  %v247 = vpop.f32.mrb[0].mxu0
  %v248 = vadd.f32 %v51, %v247
  %249 = vdwg.mxu0
  %250 = vmatprep.subr.bf16.mxu0 %v135
  %251 = vmatpush1.bf16.msra.mxu0 %v134
  %252 = vmatprep.subr.bf16.mxu0 %v139
  %253 = vmatpush1.bf16.msra.mxu0 %v138
  %254 = vmatprep.subr.bf16.mxu0 %v143
  %255 = vmatpush1.bf16.msra.mxu0 %v142
  %256 = vmatprep.subr.bf16.mxu0 %v147
  %257 = vmatpush1.bf16.msra.mxu0 %v146
  %258 = vmatprep.subr.bf16.mxu0 0
  %259 = vmatpush1.bf16.msra.mxu0 0
  %260 = vmatprep.subr.bf16.mxu0 0
  %261 = vmatpush1.bf16.msra.mxu0 0
  %262 = vmatprep.subr.bf16.mxu0 0
  %263 = vmatpush1.bf16.msra.mxu0 0
  %264 = vmatprep.subr.bf16.mxu0 0
  %265 = vmatpush1.bf16.msra.mxu0 0
  %266 = vmatprep.subr.bf16.mxu0 0
  %267 = vmatpush1.bf16.msra.mxu0 0
  %268 = vmatprep.subr.bf16.mxu0 0
  %269 = vmatpush1.bf16.msra.mxu0 0
  %270 = vmatprep.subr.bf16.mxu0 0
  %271 = vmatpush1.bf16.msra.mxu0 0
  %272 = vmatprep.subr.bf16.mxu0 0
  %273 = vmatpush1.bf16.msra.mxu0 0
  %274 = vmatprep.subr.bf16.mxu0 0
  %275 = vmatpush1.bf16.msra.mxu0 0
  %276 = vmatprep.subr.bf16.mxu0 0
  %277 = vmatpush1.bf16.msra.mxu0 0
  %278 = vmatprep.subr.bf16.mxu0 0
  %279 = vmatpush1.bf16.msra.mxu0 0
  %280 = vmatprep.subr.bf16.mxu0 0
  %281 = vmatpush1.bf16.msra.mxu0 0
  %282 = vmatprep.mubr.bf16.mxu0 0
  %283 = vmatmul.mubr.bf16.gmra.mrb[0].mxu0 %v166
  %v284 = vpop.f32.mrb[0].mxu0
  %v285 = vadd.f32 %v55, %v284
  %v286 = vpop.f32.mrb[0].mxu0
  %v287 = vadd.f32 %v59, %v286
  %v288 = vpop.f32.mrb[0].mxu0
  %v289 = vadd.f32 %v55, %v288
  %v290 = vpop.f32.mrb[0].mxu0
  %v291 = vadd.f32 %v59, %v290
  %292 = vmatprep.mubr.bf16.mxu0 0
  %293 = vmatmul.mubr.bf16.gmra.mrb[0].mxu0 %v169
  %v294 = vpop.f32.mrb[0].mxu0
  %v295 = vadd.f32 %v55, %v294
  %v296 = vpop.f32.mrb[0].mxu0
  %v297 = vadd.f32 %v59, %v296
  %v298 = vpop.f32.mrb[0].mxu0
  %v299 = vadd.f32 %v55, %v298
  %v300 = vpop.f32.mrb[0].mxu0
  %v301 = vadd.f32 %v59, %v300
  %302 = vmatprep.mubr.bf16.mxu0 0
  %303 = vmatmul.mubr.bf16.gmra.mrb[0].mxu0 %v172
  %v304 = vpop.f32.mrb[0].mxu0
  %v305 = vadd.f32 %v55, %v304
  %v306 = vpop.f32.mrb[0].mxu0
  %v307 = vadd.f32 %v59, %v306
  %v308 = vpop.f32.mrb[0].mxu0
  %v309 = vadd.f32 %v55, %v308
  %v310 = vpop.f32.mrb[0].mxu0
  %v311 = vadd.f32 %v59, %v310
  %312 = vmatprep.mubr.bf16.mxu0 0
  %313 = vmatmul.mubr.bf16.gmra.mrb[0].mxu0 %v175
  %v314 = vpop.f32.mrb[0].mxu0
  %v315 = vadd.f32 %v55, %v314
  %v316 = vpop.f32.mrb[0].mxu0
  %v317 = vadd.f32 %v59, %v316
  %v318 = vpop.f32.mrb[0].mxu0
  %v319 = vadd.f32 %v55, %v318
  %v320 = vpop.f32.mrb[0].mxu0
  %v321 = vadd.f32 %v59, %v320
  %322 = vdwg.mxu0
  %323 = vst [vmem:[#allocation2] sm:$0xff] %v212
  %324 = vst [vmem:[#allocation2 + $0x8] sm:$0xff] %v214
  %325 = vst [vmem:[#allocation2 + $0x10] sm:$0xff] %v285
  %326 = vst [vmem:[#allocation2 + $0x18] sm:$0xff] %v287
  %327 = vst [vmem:[#allocation2 + $0x20] sm:$0xff] %v216
  %328 = vst [vmem:[#allocation2 + $0x28] sm:$0xff] %v218
  %329 = vst [vmem:[#allocation2 + $0x30] sm:$0xff] %v289
  %330 = vst [vmem:[#allocation2 + $0x38] sm:$0xff] %v291
  %331 = vst [vmem:[#allocation2 + $0x40] sm:$0xff] %v222
  %332 = vst [vmem:[#allocation2 + $0x48] sm:$0xff] %v224
  %333 = vst [vmem:[#allocation2 + $0x50] sm:$0xff] %v295
  %334 = vst [vmem:[#allocation2 + $0x58] sm:$0xff] %v297
  %335 = vst [vmem:[#allocation2 + $0x60] sm:$0xff] %v226
  %336 = vst [vmem:[#allocation2 + $0x68] sm:$0xff] %v228
  %337 = vst [vmem:[#allocation2 + $0x70] sm:$0xff] %v299
  %338 = vst [vmem:[#allocation2 + $0x78] sm:$0xff] %v301
  %339 = vst [vmem:[#allocation2 + $0x80] sm:$0xff] %v232
  %340 = vst [vmem:[#allocation2 + $0x88] sm:$0xff] %v234
  %341 = vst [vmem:[#allocation2 + $0x90] sm:$0xff] %v305
  %342 = vst [vmem:[#allocation2 + $0x98] sm:$0xff] %v307
  %343 = vst [vmem:[#allocation2 + $0xa0] sm:$0xff] %v236
  %344 = vst [vmem:[#allocation2 + $0xa8] sm:$0xff] %v238
  %345 = vst [vmem:[#allocation2 + $0xb0] sm:$0xff] %v309
  %346 = vst [vmem:[#allocation2 + $0xb8] sm:$0xff] %v311
  %347 = vst [vmem:[#allocation2 + $0xc0] sm:$0xff] %v242
  %348 = vst [vmem:[#allocation2 + $0xc8] sm:$0xff] %v244
  %349 = vst [vmem:[#allocation2 + $0xd0] sm:$0xff] %v315
  %350 = vst [vmem:[#allocation2 + $0xd8] sm:$0xff] %v317
  %351 = vst [vmem:[#allocation2 + $0xe0] sm:$0xff] %v246
  %352 = vst [vmem:[#allocation2 + $0xe8] sm:$0xff] %v248
  %353 = vst [vmem:[#allocation2 + $0xf0] sm:$0xff] %v319
  %354 = vst [vmem:[#allocation2 + $0xf8] sm:$0xff] %v321
  %v355 = vld [vmem:[#allocation2] sm:$0xff]
  %v356 = vld [vmem:[#allocation2 + $0x8] sm:$0xff]
  %v357 = vld [vmem:[%s3] sm:$0xff]
  %v358 = vld [vmem:[%s3 + $0x8] sm:$0xff]
  %v359 = vld [vmem:[%s3 + $0x10] sm:$0xff]
  %v360 = vld [vmem:[%s3 + $0x18] sm:$0xff]
  %v361 = vld [vmem:[%s3 + $0x20] sm:$0xff]
  %v362 = vld [vmem:[%s3 + $0x28] sm:$0xff]
  %v363 = vld [vmem:[%s3 + $0x30] sm:$0xff]
  %v364 = vld [vmem:[%s3 + $0x38] sm:$0xff]
  %v373 = vunpack.c.l.b16 %v357
  %v374 = vunpack.c.h.b16 %v357
  %v375 = vunpack.c.l.b16 %v358
  %v376 = vunpack.c.h.b16 %v358
  %v377 = vunpack.c.l.b16 %v359
  %v378 = vunpack.c.h.b16 %v359
  %v379 = vunpack.c.l.b16 %v360
  %v380 = vunpack.c.h.b16 %v360
  %v381 = vunpack.c.l.b16 %v361
  %v382 = vunpack.c.h.b16 %v361
  %v383 = vunpack.c.l.b16 %v362
  %v384 = vunpack.c.h.b16 %v362
  %v385 = vunpack.c.l.b16 %v363
  %v386 = vunpack.c.h.b16 %v363
  %v387 = vunpack.c.l.b16 %v364
  %v388 = vunpack.c.h.b16 %v364
  %v389 = vpack.c.b16 %v375, %v373
  %v390 = vpack.c.b16 %v376, %v374
  %v391 = vpack.c.b16 %v379, %v377
  %v392 = vpack.c.b16 %v380, %v378
  %v393 = vpack.c.b16 %v383, %v381
  %v394 = vpack.c.b16 %v384, %v382
  %v395 = vpack.c.b16 %v387, %v385
  %v396 = vpack.c.b16 %v388, %v386
  %v406 = vsel %vm164, 0, 0
  %408 = vmatprep.subr.bf16.mxu0 %v390
  %409 = vmatpush1.bf16.msra.mxu0 %v389
  %410 = vmatprep.subr.bf16.mxu0 %v392
  %411 = vmatpush1.bf16.msra.mxu0 %v391
  %412 = vmatprep.subr.bf16.mxu0 %v394
  %413 = vmatpush1.bf16.msra.mxu0 %v393
  %414 = vmatprep.subr.bf16.mxu0 %v396
  %415 = vmatpush1.bf16.msra.mxu0 %v395
  %416 = vmatprep.subr.bf16.mxu0 0
  %417 = vmatpush1.bf16.msra.mxu0 0
  %418 = vmatprep.subr.bf16.mxu0 0
  %419 = vmatpush1.bf16.msra.mxu0 0
  %420 = vmatprep.subr.bf16.mxu0 0
  %421 = vmatpush1.bf16.msra.mxu0 0
  %422 = vmatprep.subr.bf16.mxu0 0
  %423 = vmatpush1.bf16.msra.mxu0 0
  %424 = vmatprep.subr.bf16.mxu0 0
  %425 = vmatpush1.bf16.msra.mxu0 0
  %426 = vmatprep.subr.bf16.mxu0 0
  %427 = vmatpush1.bf16.msra.mxu0 0
  %428 = vmatprep.subr.bf16.mxu0 0
  %429 = vmatpush1.bf16.msra.mxu0 0
  %430 = vmatprep.subr.bf16.mxu0 0
  %431 = vmatpush1.bf16.msra.mxu0 0
  %432 = vmatprep.subr.bf16.mxu0 0
  %433 = vmatpush1.bf16.msra.mxu0 0
  %434 = vmatprep.subr.bf16.mxu0 0
  %435 = vmatpush1.bf16.msra.mxu0 0
  %436 = vmatprep.subr.bf16.mxu0 0
  %437 = vmatpush1.bf16.msra.mxu0 0
  %438 = vmatprep.subr.bf16.mxu0 0
  %439 = vmatpush1.bf16.msra.mxu0 0
  %440 = vmatprep.mubr.bf16.mxu0 0
  %441 = vmatmul.mubr.bf16.gmra.mrb[0].mxu0 %v406
  %v442 = vpop.f32.mrb[0].mxu0
  %v443 = vadd.f32 0.0, %v442
  %v444 = vpop.f32.mrb[0].mxu0
  %v445 = vadd.f32 0.0, %v444
  %v446 = vpop.f32.mrb[0].mxu0
  %v447 = vpop.f32.mrb[0].mxu0
  %448 = vdwg.mxu0
  %v449 = vadd.f32 %v355, %v443
  %v450 = vadd.f32 %v356, %v445
  %v451 = vmul.f32 %v449, 0.5
  %v452 = vtanh.pop %v451
  %v453 = vmul.f32 %v452, 0.5
  %v454 = vadd.f32 %v453, 0.5
  %v455 = vtanh.pop %v450
  %v456 = vmul.f32 %v450, 0.5
  %v457 = vtanh.pop %v456
  %v458 = vmul.f32 %v457, 0.5
  %v459 = vadd.f32 %v458, 0.5
  %v460 = vmul.f32 %v454, 0.0
  %v461 = vmul.f32 %v454, %v455
  %463 = vrot.lane.b32.xlu0 %v461, 64
  %v464 = vpop.permute.xlu0 %463
  %v466 = vadd.f32 %v460, %v464
  %v467 = vtanh.pop %v466
  %v468 = vmul.f32 %v459, %v467
  %v469 = vld [vmem:[#allocation2 + $0x20] sm:$0xff]
  %v470 = vld [vmem:[#allocation2 + $0x28] sm:$0xff]
  %v471 = vpack.c.bf16 %v468, %v468
  %473 = vrot.lane.b32.xlu0 %v471, 64
  %v474 = vpop.permute.xlu0 %473
  %v476 = vsel %vm164, %v474, 0
  %478 = vmatprep.subr.bf16.mxu0 %v390
  %479 = vmatpush1.bf16.msra.mxu0 %v389
  %480 = vmatprep.subr.bf16.mxu0 %v392
  %481 = vmatpush1.bf16.msra.mxu0 %v391
  %482 = vmatprep.subr.bf16.mxu0 %v394
  %483 = vmatpush1.bf16.msra.mxu0 %v393
  %484 = vmatprep.subr.bf16.mxu0 %v396
  %485 = vmatpush1.bf16.msra.mxu0 %v395
  %486 = vmatprep.subr.bf16.mxu0 0
  %487 = vmatpush1.bf16.msra.mxu0 0
  %488 = vmatprep.subr.bf16.mxu0 0
  %489 = vmatpush1.bf16.msra.mxu0 0
  %490 = vmatprep.subr.bf16.mxu0 0
  %491 = vmatpush1.bf16.msra.mxu0 0
  %492 = vmatprep.subr.bf16.mxu0 0
  %493 = vmatpush1.bf16.msra.mxu0 0
  %494 = vmatprep.subr.bf16.mxu0 0
  %495 = vmatpush1.bf16.msra.mxu0 0
  %496 = vmatprep.subr.bf16.mxu0 0
  %497 = vmatpush1.bf16.msra.mxu0 0
  %498 = vmatprep.subr.bf16.mxu0 0
  %499 = vmatpush1.bf16.msra.mxu0 0
  %500 = vmatprep.subr.bf16.mxu0 0
  %501 = vmatpush1.bf16.msra.mxu0 0
  %502 = vmatprep.subr.bf16.mxu0 0
  %503 = vmatpush1.bf16.msra.mxu0 0
  %504 = vmatprep.subr.bf16.mxu0 0
  %505 = vmatpush1.bf16.msra.mxu0 0
  %506 = vmatprep.subr.bf16.mxu0 0
  %507 = vmatpush1.bf16.msra.mxu0 0
  %508 = vmatprep.subr.bf16.mxu0 0
  %509 = vmatpush1.bf16.msra.mxu0 0
  %510 = vmatprep.mubr.bf16.mxu0 0
  %511 = vmatmul.mubr.bf16.gmra.mrb[0].mxu0 %v476
  %v512 = vpop.f32.mrb[0].mxu0
  %v513 = vadd.f32 0.0, %v512
  %v514 = vpop.f32.mrb[0].mxu0
  %v515 = vadd.f32 0.0, %v514
  %v516 = vpop.f32.mrb[0].mxu0
  %v517 = vpop.f32.mrb[0].mxu0
  %518 = vdwg.mxu0
  %v519 = vadd.f32 %v469, %v513
  %v520 = vadd.f32 %v470, %v515
  %v521 = vmul.f32 %v519, 0.5
  %v522 = vtanh.pop %v521
  %v523 = vmul.f32 %v522, 0.5
  %v524 = vadd.f32 %v523, 0.5
  %v525 = vtanh.pop %v520
  %v526 = vmul.f32 %v520, 0.5
  %v527 = vtanh.pop %v526
  %v528 = vmul.f32 %v527, 0.5
  %v529 = vadd.f32 %v528, 0.5
  %v530 = vmul.f32 %v524, %v466
  %v531 = vmul.f32 %v524, %v525
  %533 = vrot.lane.b32.xlu0 %v531, 64
  %v534 = vpop.permute.xlu0 %533
  %v536 = vadd.f32 %v530, %v534
  %v537 = vtanh.pop %v536
  %v538 = vmul.f32 %v529, %v537
  %v539 = vld [vmem:[#allocation2 + $0x40] sm:$0xff]
  %v540 = vld [vmem:[#allocation2 + $0x48] sm:$0xff]
  %v541 = vpack.c.bf16 %v538, %v538
  %543 = vrot.lane.b32.xlu0 %v541, 64
  %v544 = vpop.permute.xlu0 %543
  %v546 = vsel %vm164, %v544, 0
  %548 = vmatprep.subr.bf16.mxu0 %v390
  %549 = vmatpush1.bf16.msra.mxu0 %v389
  %550 = vmatprep.subr.bf16.mxu0 %v392
  %551 = vmatpush1.bf16.msra.mxu0 %v391
  %552 = vmatprep.subr.bf16.mxu0 %v394
  %553 = vmatpush1.bf16.msra.mxu0 %v393
  %554 = vmatprep.subr.bf16.mxu0 %v396
  %555 = vmatpush1.bf16.msra.mxu0 %v395
  %556 = vmatprep.subr.bf16.mxu0 0
  %557 = vmatpush1.bf16.msra.mxu0 0
  %558 = vmatprep.subr.bf16.mxu0 0
  %559 = vmatpush1.bf16.msra.mxu0 0
  %560 = vmatprep.subr.bf16.mxu0 0
  %561 = vmatpush1.bf16.msra.mxu0 0
  %562 = vmatprep.subr.bf16.mxu0 0
  %563 = vmatpush1.bf16.msra.mxu0 0
  %564 = vmatprep.subr.bf16.mxu0 0
  %565 = vmatpush1.bf16.msra.mxu0 0
  %566 = vmatprep.subr.bf16.mxu0 0
  %567 = vmatpush1.bf16.msra.mxu0 0
  %568 = vmatprep.subr.bf16.mxu0 0
  %569 = vmatpush1.bf16.msra.mxu0 0
  %570 = vmatprep.subr.bf16.mxu0 0
  %571 = vmatpush1.bf16.msra.mxu0 0
  %572 = vmatprep.subr.bf16.mxu0 0
  %573 = vmatpush1.bf16.msra.mxu0 0
  %574 = vmatprep.subr.bf16.mxu0 0
  %575 = vmatpush1.bf16.msra.mxu0 0
  %576 = vmatprep.subr.bf16.mxu0 0
  %577 = vmatpush1.bf16.msra.mxu0 0
  %578 = vmatprep.subr.bf16.mxu0 0
  %579 = vmatpush1.bf16.msra.mxu0 0
  %580 = vmatprep.mubr.bf16.mxu0 0
  %581 = vmatmul.mubr.bf16.gmra.mrb[0].mxu0 %v546
  %v582 = vpop.f32.mrb[0].mxu0
  %v583 = vadd.f32 0.0, %v582
  %v584 = vpop.f32.mrb[0].mxu0
  %v585 = vadd.f32 0.0, %v584
  %v586 = vpop.f32.mrb[0].mxu0
  %v587 = vpop.f32.mrb[0].mxu0
  %588 = vdwg.mxu0
  %v589 = vadd.f32 %v539, %v583
  %v590 = vadd.f32 %v540, %v585
  %v591 = vmul.f32 %v589, 0.5
  %v592 = vtanh.pop %v591
  %v593 = vmul.f32 %v592, 0.5
  %v594 = vadd.f32 %v593, 0.5
  %v595 = vtanh.pop %v590
  %v596 = vmul.f32 %v590, 0.5
  %v597 = vtanh.pop %v596
  %v598 = vmul.f32 %v597, 0.5
  %v599 = vadd.f32 %v598, 0.5
  %v600 = vmul.f32 %v594, %v536
  %v601 = vmul.f32 %v594, %v595
  %603 = vrot.lane.b32.xlu0 %v601, 64
  %v604 = vpop.permute.xlu0 %603
  %v606 = vadd.f32 %v600, %v604
  %v607 = vtanh.pop %v606
  %v608 = vmul.f32 %v599, %v607
  %v609 = vld [vmem:[#allocation2 + $0x60] sm:$0xff]
  %v610 = vld [vmem:[#allocation2 + $0x68] sm:$0xff]
  %v611 = vpack.c.bf16 %v608, %v608
  %613 = vrot.lane.b32.xlu0 %v611, 64
  %v614 = vpop.permute.xlu0 %613
  %v616 = vsel %vm164, %v614, 0
  %618 = vmatprep.subr.bf16.mxu0 %v390
  %619 = vmatpush1.bf16.msra.mxu0 %v389
  %620 = vmatprep.subr.bf16.mxu0 %v392
  %621 = vmatpush1.bf16.msra.mxu0 %v391
  %622 = vmatprep.subr.bf16.mxu0 %v394
  %623 = vmatpush1.bf16.msra.mxu0 %v393
  %624 = vmatprep.subr.bf16.mxu0 %v396
  %625 = vmatpush1.bf16.msra.mxu0 %v395
  %626 = vmatprep.subr.bf16.mxu0 0
  %627 = vmatpush1.bf16.msra.mxu0 0
  %628 = vmatprep.subr.bf16.mxu0 0
  %629 = vmatpush1.bf16.msra.mxu0 0
  %630 = vmatprep.subr.bf16.mxu0 0
  %631 = vmatpush1.bf16.msra.mxu0 0
  %632 = vmatprep.subr.bf16.mxu0 0
  %633 = vmatpush1.bf16.msra.mxu0 0
  %634 = vmatprep.subr.bf16.mxu0 0
  %635 = vmatpush1.bf16.msra.mxu0 0
  %636 = vmatprep.subr.bf16.mxu0 0
  %637 = vmatpush1.bf16.msra.mxu0 0
  %638 = vmatprep.subr.bf16.mxu0 0
  %639 = vmatpush1.bf16.msra.mxu0 0
  %640 = vmatprep.subr.bf16.mxu0 0
  %641 = vmatpush1.bf16.msra.mxu0 0
  %642 = vmatprep.subr.bf16.mxu0 0
  %643 = vmatpush1.bf16.msra.mxu0 0
  %644 = vmatprep.subr.bf16.mxu0 0
  %645 = vmatpush1.bf16.msra.mxu0 0
  %646 = vmatprep.subr.bf16.mxu0 0
  %647 = vmatpush1.bf16.msra.mxu0 0
  %648 = vmatprep.subr.bf16.mxu0 0
  %649 = vmatpush1.bf16.msra.mxu0 0
  %650 = vmatprep.mubr.bf16.mxu0 0
  %651 = vmatmul.mubr.bf16.gmra.mrb[0].mxu0 %v616
  %v652 = vpop.f32.mrb[0].mxu0
  %v653 = vadd.f32 0.0, %v652
  %v654 = vpop.f32.mrb[0].mxu0
  %v655 = vadd.f32 0.0, %v654
  %v656 = vpop.f32.mrb[0].mxu0
  %v657 = vpop.f32.mrb[0].mxu0
  %658 = vdwg.mxu0
  %v659 = vadd.f32 %v609, %v653
  %v660 = vadd.f32 %v610, %v655
  %v661 = vmul.f32 %v659, 0.5
  %v662 = vtanh.pop %v661
  %v663 = vmul.f32 %v662, 0.5
  %v664 = vadd.f32 %v663, 0.5
  %v665 = vtanh.pop %v660
  %v666 = vmul.f32 %v660, 0.5
  %v667 = vtanh.pop %v666
  %v668 = vmul.f32 %v667, 0.5
  %v669 = vadd.f32 %v668, 0.5
  %v670 = vmul.f32 %v664, %v606
  %v671 = vmul.f32 %v664, %v665
  %673 = vrot.lane.b32.xlu0 %v671, 64
  %v674 = vpop.permute.xlu0 %673
  %v676 = vadd.f32 %v670, %v674
  %v677 = vtanh.pop %v676
  %v678 = vmul.f32 %v669, %v677
  %v679 = vld [vmem:[#allocation2 + $0x80] sm:$0xff]
  %v680 = vld [vmem:[#allocation2 + $0x88] sm:$0xff]
  %v681 = vpack.c.bf16 %v678, %v678
  %683 = vrot.lane.b32.xlu0 %v681, 64
  %v684 = vpop.permute.xlu0 %683
  %v686 = vsel %vm164, %v684, 0
  %688 = vmatprep.subr.bf16.mxu0 %v390
  %689 = vmatpush1.bf16.msra.mxu0 %v389
  %690 = vmatprep.subr.bf16.mxu0 %v392
  %691 = vmatpush1.bf16.msra.mxu0 %v391
  %692 = vmatprep.subr.bf16.mxu0 %v394
  %693 = vmatpush1.bf16.msra.mxu0 %v393
  %694 = vmatprep.subr.bf16.mxu0 %v396
  %695 = vmatpush1.bf16.msra.mxu0 %v395
  %696 = vmatprep.subr.bf16.mxu0 0
  %697 = vmatpush1.bf16.msra.mxu0 0
  %698 = vmatprep.subr.bf16.mxu0 0
  %699 = vmatpush1.bf16.msra.mxu0 0
  %700 = vmatprep.subr.bf16.mxu0 0
  %701 = vmatpush1.bf16.msra.mxu0 0
  %702 = vmatprep.subr.bf16.mxu0 0
  %703 = vmatpush1.bf16.msra.mxu0 0
  %704 = vmatprep.subr.bf16.mxu0 0
  %705 = vmatpush1.bf16.msra.mxu0 0
  %706 = vmatprep.subr.bf16.mxu0 0
  %707 = vmatpush1.bf16.msra.mxu0 0
  %708 = vmatprep.subr.bf16.mxu0 0
  %709 = vmatpush1.bf16.msra.mxu0 0
  %710 = vmatprep.subr.bf16.mxu0 0
  %711 = vmatpush1.bf16.msra.mxu0 0
  %712 = vmatprep.subr.bf16.mxu0 0
  %713 = vmatpush1.bf16.msra.mxu0 0
  %714 = vmatprep.subr.bf16.mxu0 0
  %715 = vmatpush1.bf16.msra.mxu0 0
  %716 = vmatprep.subr.bf16.mxu0 0
  %717 = vmatpush1.bf16.msra.mxu0 0
  %718 = vmatprep.subr.bf16.mxu0 0
  %719 = vmatpush1.bf16.msra.mxu0 0
  %720 = vmatprep.mubr.bf16.mxu0 0
  %721 = vmatmul.mubr.bf16.gmra.mrb[0].mxu0 %v686
  %v722 = vpop.f32.mrb[0].mxu0
  %v723 = vadd.f32 0.0, %v722
  %v724 = vpop.f32.mrb[0].mxu0
  %v725 = vadd.f32 0.0, %v724
  %v726 = vpop.f32.mrb[0].mxu0
  %v727 = vpop.f32.mrb[0].mxu0
  %728 = vdwg.mxu0
  %v729 = vadd.f32 %v679, %v723
  %v730 = vadd.f32 %v680, %v725
  %v731 = vmul.f32 %v729, 0.5
  %v732 = vtanh.pop %v731
  %v733 = vmul.f32 %v732, 0.5
  %v734 = vadd.f32 %v733, 0.5
  %v735 = vtanh.pop %v730
  %v736 = vmul.f32 %v730, 0.5
  %v737 = vtanh.pop %v736
  %v738 = vmul.f32 %v737, 0.5
  %v739 = vadd.f32 %v738, 0.5
  %v740 = vmul.f32 %v734, %v676
  %v741 = vmul.f32 %v734, %v735
  %743 = vrot.lane.b32.xlu0 %v741, 64
  %v744 = vpop.permute.xlu0 %743
  %v746 = vadd.f32 %v740, %v744
  %v747 = vtanh.pop %v746
  %v748 = vmul.f32 %v739, %v747
  %v749 = vld [vmem:[#allocation2 + $0xa0] sm:$0xff]
  %v750 = vld [vmem:[#allocation2 + $0xa8] sm:$0xff]
  %v751 = vpack.c.bf16 %v748, %v748
  %753 = vrot.lane.b32.xlu0 %v751, 64
  %v754 = vpop.permute.xlu0 %753
  %v756 = vsel %vm164, %v754, 0
  %758 = vmatprep.subr.bf16.mxu0 %v390
  %759 = vmatpush1.bf16.msra.mxu0 %v389
  %760 = vmatprep.subr.bf16.mxu0 %v392
  %761 = vmatpush1.bf16.msra.mxu0 %v391
  %762 = vmatprep.subr.bf16.mxu0 %v394
  %763 = vmatpush1.bf16.msra.mxu0 %v393
  %764 = vmatprep.subr.bf16.mxu0 %v396
  %765 = vmatpush1.bf16.msra.mxu0 %v395
  %766 = vmatprep.subr.bf16.mxu0 0
  %767 = vmatpush1.bf16.msra.mxu0 0
  %768 = vmatprep.subr.bf16.mxu0 0
  %769 = vmatpush1.bf16.msra.mxu0 0
  %770 = vmatprep.subr.bf16.mxu0 0
  %771 = vmatpush1.bf16.msra.mxu0 0
  %772 = vmatprep.subr.bf16.mxu0 0
  %773 = vmatpush1.bf16.msra.mxu0 0
  %774 = vmatprep.subr.bf16.mxu0 0
  %775 = vmatpush1.bf16.msra.mxu0 0
  %776 = vmatprep.subr.bf16.mxu0 0
  %777 = vmatpush1.bf16.msra.mxu0 0
  %778 = vmatprep.subr.bf16.mxu0 0
  %779 = vmatpush1.bf16.msra.mxu0 0
  %780 = vmatprep.subr.bf16.mxu0 0
  %781 = vmatpush1.bf16.msra.mxu0 0
  %782 = vmatprep.subr.bf16.mxu0 0
  %783 = vmatpush1.bf16.msra.mxu0 0
  %784 = vmatprep.subr.bf16.mxu0 0
  %785 = vmatpush1.bf16.msra.mxu0 0
  %786 = vmatprep.subr.bf16.mxu0 0
  %787 = vmatpush1.bf16.msra.mxu0 0
  %788 = vmatprep.subr.bf16.mxu0 0
  %789 = vmatpush1.bf16.msra.mxu0 0
  %790 = vmatprep.mubr.bf16.mxu0 0
  %791 = vmatmul.mubr.bf16.gmra.mrb[0].mxu0 %v756
  %v792 = vpop.f32.mrb[0].mxu0
  %v793 = vadd.f32 0.0, %v792
  %v794 = vpop.f32.mrb[0].mxu0
  %v795 = vadd.f32 0.0, %v794
  %v796 = vpop.f32.mrb[0].mxu0
  %v797 = vpop.f32.mrb[0].mxu0
  %798 = vdwg.mxu0
  %v799 = vadd.f32 %v749, %v793
  %v800 = vadd.f32 %v750, %v795
  %v801 = vmul.f32 %v799, 0.5
  %v802 = vtanh.pop %v801
  %v803 = vmul.f32 %v802, 0.5
  %v804 = vadd.f32 %v803, 0.5
  %v805 = vtanh.pop %v800
  %v806 = vmul.f32 %v800, 0.5
  %v807 = vtanh.pop %v806
  %v808 = vmul.f32 %v807, 0.5
  %v809 = vadd.f32 %v808, 0.5
  %v810 = vmul.f32 %v804, %v746
  %v811 = vmul.f32 %v804, %v805
  %813 = vrot.lane.b32.xlu0 %v811, 64
  %v814 = vpop.permute.xlu0 %813
  %v816 = vadd.f32 %v810, %v814
  %v817 = vtanh.pop %v816
  %v818 = vmul.f32 %v809, %v817
  %v819 = vld [vmem:[#allocation2 + $0xc0] sm:$0xff]
  %v820 = vld [vmem:[#allocation2 + $0xc8] sm:$0xff]
  %v821 = vpack.c.bf16 %v818, %v818
  %823 = vrot.lane.b32.xlu0 %v821, 64
  %v824 = vpop.permute.xlu0 %823
  %v826 = vsel %vm164, %v824, 0
  %828 = vmatprep.subr.bf16.mxu0 %v390
  %829 = vmatpush1.bf16.msra.mxu0 %v389
  %830 = vmatprep.subr.bf16.mxu0 %v392
  %831 = vmatpush1.bf16.msra.mxu0 %v391
  %832 = vmatprep.subr.bf16.mxu0 %v394
  %833 = vmatpush1.bf16.msra.mxu0 %v393
  %834 = vmatprep.subr.bf16.mxu0 %v396
  %835 = vmatpush1.bf16.msra.mxu0 %v395
  %836 = vmatprep.subr.bf16.mxu0 0
  %837 = vmatpush1.bf16.msra.mxu0 0
  %838 = vmatprep.subr.bf16.mxu0 0
  %839 = vmatpush1.bf16.msra.mxu0 0
  %840 = vmatprep.subr.bf16.mxu0 0
  %841 = vmatpush1.bf16.msra.mxu0 0
  %842 = vmatprep.subr.bf16.mxu0 0
  %843 = vmatpush1.bf16.msra.mxu0 0
  %844 = vmatprep.subr.bf16.mxu0 0
  %845 = vmatpush1.bf16.msra.mxu0 0
  %846 = vmatprep.subr.bf16.mxu0 0
  %847 = vmatpush1.bf16.msra.mxu0 0
  %848 = vmatprep.subr.bf16.mxu0 0
  %849 = vmatpush1.bf16.msra.mxu0 0
  %850 = vmatprep.subr.bf16.mxu0 0
  %851 = vmatpush1.bf16.msra.mxu0 0
  %852 = vmatprep.subr.bf16.mxu0 0
  %853 = vmatpush1.bf16.msra.mxu0 0
  %854 = vmatprep.subr.bf16.mxu0 0
  %855 = vmatpush1.bf16.msra.mxu0 0
  %856 = vmatprep.subr.bf16.mxu0 0
  %857 = vmatpush1.bf16.msra.mxu0 0
  %858 = vmatprep.subr.bf16.mxu0 0
  %859 = vmatpush1.bf16.msra.mxu0 0
  %860 = vmatprep.mubr.bf16.mxu0 0
  %861 = vmatmul.mubr.bf16.gmra.mrb[0].mxu0 %v826
  %v862 = vpop.f32.mrb[0].mxu0
  %v863 = vadd.f32 0.0, %v862
  %v864 = vpop.f32.mrb[0].mxu0
  %v865 = vadd.f32 0.0, %v864
  %v866 = vpop.f32.mrb[0].mxu0
  %v867 = vpop.f32.mrb[0].mxu0
  %868 = vdwg.mxu0
  %v869 = vadd.f32 %v819, %v863
  %v870 = vadd.f32 %v820, %v865
  %v871 = vmul.f32 %v869, 0.5
  %v872 = vtanh.pop %v871
  %v873 = vmul.f32 %v872, 0.5
  %v874 = vadd.f32 %v873, 0.5
  %v875 = vtanh.pop %v870
  %v876 = vmul.f32 %v870, 0.5
  %v877 = vtanh.pop %v876
  %v878 = vmul.f32 %v877, 0.5
  %v879 = vadd.f32 %v878, 0.5
  %v880 = vmul.f32 %v874, %v816
  %v881 = vmul.f32 %v874, %v875
  %883 = vrot.lane.b32.xlu0 %v881, 64
  %v884 = vpop.permute.xlu0 %883
  %v886 = vadd.f32 %v880, %v884
  %v887 = vtanh.pop %v886
  %v888 = vmul.f32 %v879, %v887
  %v889 = vld [vmem:[#allocation2 + $0xe0] sm:$0xff]
  %v890 = vld [vmem:[#allocation2 + $0xe8] sm:$0xff]
  %v891 = vpack.c.bf16 %v888, %v888
  %893 = vrot.lane.b32.xlu0 %v891, 64
  %v894 = vpop.permute.xlu0 %893
  %v896 = vsel %vm164, %v894, 0
  %898 = vmatprep.subr.bf16.mxu0 %v390
  %899 = vmatpush1.bf16.msra.mxu0 %v389
  %900 = vmatprep.subr.bf16.mxu0 %v392
  %901 = vmatpush1.bf16.msra.mxu0 %v391
  %902 = vmatprep.subr.bf16.mxu0 %v394
  %903 = vmatpush1.bf16.msra.mxu0 %v393
  %904 = vmatprep.subr.bf16.mxu0 %v396
  %905 = vmatpush1.bf16.msra.mxu0 %v395
  %906 = vmatprep.subr.bf16.mxu0 0
  %907 = vmatpush1.bf16.msra.mxu0 0
  %908 = vmatprep.subr.bf16.mxu0 0
  %909 = vmatpush1.bf16.msra.mxu0 0
  %910 = vmatprep.subr.bf16.mxu0 0
  %911 = vmatpush1.bf16.msra.mxu0 0
  %912 = vmatprep.subr.bf16.mxu0 0
  %913 = vmatpush1.bf16.msra.mxu0 0
  %914 = vmatprep.subr.bf16.mxu0 0
  %915 = vmatpush1.bf16.msra.mxu0 0
  %916 = vmatprep.subr.bf16.mxu0 0
  %917 = vmatpush1.bf16.msra.mxu0 0
  %918 = vmatprep.subr.bf16.mxu0 0
  %919 = vmatpush1.bf16.msra.mxu0 0
  %920 = vmatprep.subr.bf16.mxu0 0
  %921 = vmatpush1.bf16.msra.mxu0 0
  %922 = vmatprep.subr.bf16.mxu0 0
  %923 = vmatpush1.bf16.msra.mxu0 0
  %924 = vmatprep.subr.bf16.mxu0 0
  %925 = vmatpush1.bf16.msra.mxu0 0
  %926 = vmatprep.subr.bf16.mxu0 0
  %927 = vmatpush1.bf16.msra.mxu0 0
  %928 = vmatprep.subr.bf16.mxu0 0
  %929 = vmatpush1.bf16.msra.mxu0 0
  %930 = vmatprep.mubr.bf16.mxu0 0
  %931 = vmatmul.mubr.bf16.gmra.mrb[0].mxu0 %v896
  %v932 = vpop.f32.mrb[0].mxu0
  %v933 = vadd.f32 0.0, %v932
  %v934 = vpop.f32.mrb[0].mxu0
  %v935 = vadd.f32 0.0, %v934
  %v936 = vpop.f32.mrb[0].mxu0
  %v937 = vpop.f32.mrb[0].mxu0
  %938 = vdwg.mxu0
  %v939 = vadd.f32 %v889, %v933
  %v940 = vadd.f32 %v890, %v935
  %v941 = vmul.f32 %v939, 0.5
  %v942 = vtanh.pop %v941
  %v943 = vmul.f32 %v942, 0.5
  %v944 = vadd.f32 %v943, 0.5
  %v945 = vtanh.pop %v940
  %v946 = vmul.f32 %v940, 0.5
  %v947 = vtanh.pop %v946
  %v948 = vmul.f32 %v947, 0.5
  %v949 = vadd.f32 %v948, 0.5
  %v950 = vmul.f32 %v944, %v886
  %v951 = vmul.f32 %v944, %v945
  %953 = vrot.lane.b32.xlu0 %v951, 64
  %v954 = vpop.permute.xlu0 %953
  %v956 = vadd.f32 %v950, %v954
  %v957 = vtanh.pop %v956
  %v958 = vmul.f32 %v949, %v957
  %v959 = vld [vmem:[#allocation2 + $0xf0] sm:$0xff]
  %v960 = vld [vmem:[#allocation2 + $0xf8] sm:$0xff]
  %v961 = vmul.f32 %v959, 0.5
  %v962 = vtanh.pop %v961
  %v963 = vmul.f32 %v962, 0.5
  %v964 = vadd.f32 %v963, 0.5
  %v965 = vtanh.pop %v960
  %v966 = vmul.f32 %v960, 0.5
  %v967 = vtanh.pop %v966
  %v968 = vmul.f32 %v967, 0.5
  %v969 = vadd.f32 %v968, 0.5
  %v970 = vmul.f32 %v964, %v965
  %v971 = vtanh.pop %v970
  %973 = vrot.lane.b32.xlu0 %v971, 64
  %v974 = vpop.permute.xlu0 %973
  %v976 = vmul.f32 %v969, %v974
  %978 = vrot.lane.b32.xlu0 %v958, 64
  %v979 = vpop.permute.xlu0 %978
  %v981 = vsel %vm164, %v979, %v976
  %982 = vst [vmem:[%s4] sm:$0xff] %v981
  // Predicated region
  $region18: #{bilstm_forward.1} parent=0 // pred_check
    _
  $region19: #{bilstm_forward.1} parent=0 // pred_check_branch
    %984 = sbr.rel (0) target = $region21
  $region20: #{bilstm_forward.1} parent=0 // pred_region
    _
  $region21: #{bilstm_forward.1} parent=0 // pred_fallthru
    _
  // Predicated region
  $region22: #{bilstm_forward.1} parent=0 // pred_check
    _
  $region23: #{bilstm_forward.1} parent=0 // pred_check_branch
    %986 = sbr.rel (0) target = $region25
  $region24: #{bilstm_forward.1} parent=0 // pred_region
    _
  $region25: #{bilstm_forward.1} parent=0 // pred_fallthru
    _

</llo_original>
